<compile_context>
chip_gen: v5e
topology: v5e:2x2
jax: 0.10.0
libtpu: 0.0.40
codegen_flags: <defaults>
</compile_context>

<pallas_src>
import numpy as np
import jax
import jax.numpy as jnp
from jax.experimental import pallas as pl
from jax.experimental.pallas import tpu as pltpu

CPAD = 32   # every channel dim (<= 19) is padded to 32 lanes
SUB = 8     # sublane alignment for blocks inside the packed constant slab


# ============================================================================
# Host-side slab packing (weights, biases, boundary masks, fallback matrices)
# ============================================================================
class _Slab:
    def __init__(self):
        self._blocks, self.off, self._n = [], {}, 0

    def add(self, name, arr):
        arr = np.asarray(arr, np.float32)
        if arr.ndim == 1:
            arr = arr.reshape(1, -1)
        r, c = arr.shape
        assert c <= CPAD
        rp = ((r + SUB - 1) // SUB) * SUB            # keep offsets 8-row aligned
        blk = np.zeros((rp, CPAD), np.float32)
        blk[:r, :c] = arr
        self.off[name] = self._n
        self._n += rp
        self._blocks.append(blk)

    def build(self):
        return np.concatenate(self._blocks, axis=0)


def _bn_scale_shift(gamma, beta, mean, var, eps=1e-5):
    scale = gamma / np.sqrt(var + eps)
    shift = beta - mean * scale
    return scale.astype(np.float32), shift.astype(np.float32)


def _pad_sq(t):
    # (Cin, Cout) tap -> (CPAD, CPAD): rows >= Cin and cols >= Cout are zero, so
    # CPAD-lane activations are usable directly as the matmul LHS (no slicing).
    cin, cout = t.shape
    blk = np.zeros((CPAD, CPAD), np.float32)
    blk[:cin, :cout] = t
    return blk


def _conv_taps(w):     # torch Conv1d weight (Cout, Cin, 3) -> [(Cin, Cout)] * 3
    return [np.transpose(w[:, :, k]).astype(np.float32) for k in range(3)]


def _convT_taps(w):    # torch ConvTranspose1d weight (Cin, Cout, 3) -> [(Cin, Cout)] * 3
    return [w[:, :, k].astype(np.float32) for k in range(3)]


def _edge_masks(n, length):
    # 1.0 everywhere except the first / last position of every batch element.
    idx = np.arange(n * length) % length
    m_l = (idx != 0).astype(np.float32)
    m_r = (idx != length - 1).astype(np.float32)
    return (np.repeat(m_l[:, None], CPAD, 1), np.repeat(m_r[:, None], CPAD, 1))


def _interleave_mats(rows_in):
    eye = np.eye(rows_in, dtype=np.float32)
    e = np.zeros((2 * rows_in, rows_in), np.float32)
    o = np.zeros((2 * rows_in, rows_in), np.float32)
    e[0::2, :] = eye
    o[1::2, :] = eye
    return e, o


def build_operands(raw, L, N):
    assert L % 4 == 0, "kernel assumes history_signal divisible by 4"
    L1 = (L - 1) // 2 + 1
    L2 = (L1 - 1) // 2 + 1
    L3 = 2 * L2
    L4 = 2 * L3
    dims = (L, L1, L2, L3, L4)
    sb = _Slab()

    # boundary masks, one left/right pair per distinct layer length
    for ell in sorted(set(dims)):
        m_l, m_r = _edge_masks(N, ell)
        sb.add(("mL", ell), m_l)
        sb.add(("mR", ell), m_r)

    # layer 0: Conv(cin->18) + BN + ReLU  (BN fully folded)
    w, b = raw["conv0"]; scale, shift = _bn_scale_shift(*raw["bn0"])
    for k, t in enumerate(_conv_taps(w)):
        sb.add(("w0", k), _pad_sq(t * scale))
    sb.add("c0", b * scale + shift)

    # layer 1: Conv(18->16) + AvgPool + BN + ReLU (scaled bias before pool)
    w, b = raw["conv1"]; scale, shift = _bn_scale_shift(*raw["bn1"])
    for k, t in enumerate(_conv_taps(w)):
        sb.add(("w1", k), _pad_sq(t * scale))
    sb.add("b1", b * scale)
    sb.add("s1", shift)

    # layer 2: Conv(16->14) + AvgPool + BN + ReLU
    w, b = raw["conv2"]; scale, shift = _bn_scale_shift(*raw["bn2"])
    for k, t in enumerate(_conv_taps(w)):
        sb.add(("w2", k), _pad_sq(t * scale))
    sb.add("b2", b * scale)
    sb.add("s2", shift)

    # layer 3: ConvT(14->16, k3, s2, p1, op1) + BN + ReLU
    w, b = raw["convt3"]; scale, shift = _bn_scale_shift(*raw["bn3"])
    t = _convT_taps(w)
    for k in range(3):
        sb.add(("v3", k), _pad_sq(t[k] * scale))
    sb.add("c3", b * scale + shift)

    # layer 4: ConvT(16->18, k3, s2, p1, op1) + BN + ReLU
    w, b = raw["convt4"]; scale, shift = _bn_scale_shift(*raw["bn4"])
    t = _convT_taps(w)
    for k in range(3):
        sb.add(("v4", k), _pad_sq(t[k] * scale))
    sb.add("c4", b * scale + shift)

    # layer 5: ConvT(18->19, k3, s1, p1) == 3-tap conv with reversed taps
    w, b = raw["convt5"]; scale, shift = _bn_scale_shift(*raw["bn5"])
    t = _convT_taps(w)
    sb.add(("w5", 0), _pad_sq(t[2] * scale))
    sb.add(("w5", 1), _pad_sq(t[1] * scale))
    sb.add(("w5", 2), _pad_sq(t[0] * scale))
    sb.add("c5", b * scale + shift)

    # interleave matrices (only read by the no-strided-store fallback path)
    e3, o3 = _interleave_mats(N * L2)
    sb.add("E3", e3); sb.add("O3", o3)
    e4, o4 = _interleave_mats(N * L3)
    sb.add("E4", e4); sb.add("O4", o4)

    return jnp.asarray(sb.build()), sb.off, dims


# ============================================================================
# Fused Pallas kernel
# ============================================================================
def make_kernel(off, dims, N, strided_interleave):
    L, L1, L2, L3, L4 = dims
    f32 = jnp.float32
    third = np.float32(1.0 / 3.0)

    def kernel(x_ref, w_ref, o_ref, pbuf, ubuf3, ubuf4):
        loaded = {}

        def mask(kind, ell):                        # memoize repeated mask loads
            key = (kind, ell)
            if key not in loaded:
                loaded[key] = w_ref[pl.ds(off[key], N * ell), :]
            return loaded[key]

        def wblk(name):
            return w_ref[pl.ds(off[name], CPAD), :]           # (CPAD, CPAD)

        def bias(name):
            return w_ref[pl.ds(off[name], 1), :]              # (1, CPAD)

        def prev_rows(h, ell):                                # h[l-1], 0 at starts
            return pltpu.roll(h, 1, axis=0) * mask("mL", ell)

        def next_rows(h, ell):                                # h[l+1], 0 at ends
            return pltpu.roll(h, h.shape[0] - 1, axis=0) * mask("mR", ell)

        def conv3(h, ell, wname):
            # 3-tap conv (padding=1) as three accumulating MXU matmuls
            acc = jnp.dot(prev_rows(h, ell), wblk((wname, 0)),
                          preferred_element_type=f32)
            acc = acc + jnp.dot(h, wblk((wname, 1)), preferred_element_type=f32)
            acc = acc + jnp.dot(next_rows(h, ell), wblk((wname, 2)),
                                preferred_element_type=f32)
            return acc

        def avg_pool(y, ell_out):
            # AvgPool1d(3, stride=2, padding=1), count_include_pad=True:
            #   p[m] = (y[2m-1] + y[2m] + y[2m+1]) / 3
            rows_out = N * ell_out
            pbuf[pl.ds(0, y.shape[0]), :] = y
            a = pbuf[pl.ds(0, rows_out, 2), :]                # y[2m]
            b = pbuf[pl.ds(1, rows_out, 2), :]                # y[2m+1]
            c = pltpu.roll(b, 1, axis=0) * mask("mL", ell_out)  # y[2m-1]
            return (a + b + c) * third

        def up2(even, odd, ubuf, e_name, o_name, c_name):
            # out[2m] = even[m], out[2m+1] = odd[m]; then folded BN bias + ReLU
            rows_in = even.shape[0]
            if strided_interleave:
                ubuf[pl.ds(0, rows_in, 2), :] = even
                ubuf[pl.ds(1, rows_in, 2), :] = odd
                pre = ubuf[...]
            else:
                e_m = w_ref[pl.ds(off[e_name], 2 * rows_in), :]
                o_m = w_ref[pl.ds(off[o_name], 2 * rows_in), :]
                pre = (jnp.dot(e_m[:, :rows_in], even, preferred_element_type=f32)
                       + jnp.dot(o_m[:, :rows_in], odd, preferred_element_type=f32))
            return jnp.maximum(pre + bias(c_name), 0.0)

        # ---- encoder ------------------------------------------------------
        h = x_ref[...]                                               # (N*L, 32)
        h = jnp.maximum(conv3(h, L, "w0") + bias("c0"), 0.0)         # conv0+BN+ReLU
        y = conv3(h, L, "w1") + bias("b1")                           # conv1 (+scaled bias)
        h = jnp.maximum(avg_pool(y, L1) + bias("s1"), 0.0)           # pool+BN+ReLU
        y = conv3(h, L1, "w2") + bias("b2")                          # conv2
        h = jnp.maximum(avg_pool(y, L2) + bias("s2"), 0.0)           # pool+BN+ReLU

        # ---- decoder ------------------------------------------------------
        # ConvT(s2, p1, op1): even[m] = x[m]@V1 ; odd[m] = x[m]@V2 + x[m+1]@V0
        even = jnp.dot(h, wblk(("v3", 1)), preferred_element_type=f32)
        odd = (jnp.dot(h, wblk(("v3", 2)), preferred_element_type=f32)
               + jnp.dot(next_rows(h, L2), wblk(("v3", 0)),
                         preferred_element_type=f32))
        h = up2(even, odd, ubuf3, "E3", "O3", "c3")                  # (N*L3, 32)

        even = jnp.dot(h, wblk(("v4", 1)), preferred_element_type=f32)
        odd = (jnp.dot(h, wblk(("v4", 2)), preferred_element_type=f32)
               + jnp.dot(next_rows(h, L3), wblk(("v4", 0)),
                         preferred_element_type=f32))
        h = up2(even, odd, ubuf4, "E4", "O4", "c4")                  # (N*L4, 32)

        # ConvT stride 1 == 3-tap conv with reversed taps
        y = conv3(h, L4, "w5") + bias("c5")
        o_ref[...] = jnp.maximum(y, 0.0)

    return kernel


def make_forward(slab_shape, off, dims, N, cin, strided_interleave=True):
    L, L1, L2, L3, L4 = dims
    R0, R3, R4 = N * L, N * L3, N * L4
    kernel = make_kernel(off, dims, N, strided_interleave)

    call = pl.pallas_call(
        kernel,
        out_shape=jax.ShapeDtypeStruct((R4, CPAD), jnp.float32),
        grid=(1,),
        in_specs=[pl.BlockSpec((R0, CPAD), lambda i: (0, 0)),
                  pl.BlockSpec(slab_shape, lambda i: (0, 0))],
        out_specs=pl.BlockSpec((R4, CPAD), lambda i: (0, 0)),
        scratch_shapes=[pltpu.VMEM((R0, CPAD), jnp.float32),   # pool staging
                        pltpu.VMEM((R3, CPAD), jnp.float32),   # layer-3 interleave
                        pltpu.VMEM((R4, CPAD), jnp.float32)],  # layer-4 interleave
        compiler_params=pltpu.CompilerParams(
            dimension_semantics=("arbitrary",)),
    )

    def forward(x_ncw, slab):
        # NCW -> rows = (batch, position), lanes = channel (padded to CPAD)
        x_rows = jnp.transpose(x_ncw.astype(jnp.float32), (0, 2, 1))
        x_rows = x_rows.reshape(N * L, cin)
        x_rows = jnp.pad(x_rows, ((0, 0), (0, CPAD - cin)))
        y_rows = call(x_rows, slab)
        y = y_rows.reshape(N, L4, CPAD)[:, :, :19]
        return jnp.transpose(y, (0, 2, 1))                    # (N, 19, L4) NCW

    return forward


# ============================================================================
# Deterministic synthetic parameters (shapes follow the PyTorch module)
# ============================================================================
def _init_conv(key, cin, cout):
    k1, k2 = jax.random.split(key)
    bound = 1.0 / np.sqrt(cin * 3)
    w = jax.random.uniform(k1, (cout, cin, 3), jnp.float32, -bound, bound)
    b = jax.random.uniform(k2, (cout,), jnp.float32, -bound, bound)
    return w, b


def _init_convT(key, cin, cout):
    k1, k2 = jax.random.split(key)
    bound = 1.0 / np.sqrt(cout * 3)
    w = jax.random.uniform(k1, (cin, cout, 3), jnp.float32, -bound, bound)
    b = jax.random.uniform(k2, (cout,), jnp.float32, -bound, bound)
    return w, b


def _init_bn(key, c):
    k1, k2, k3, k4 = jax.random.split(key, 4)
    gamma = 1.0 + 0.1 * jax.random.normal(k1, (c,), jnp.float32)
    beta = 0.1 * jax.random.normal(k2, (c,), jnp.float32)
    mean = 0.1 * jax.random.normal(k3, (c,), jnp.float32)
    var = 1.0 + 0.5 * jax.random.uniform(k4, (c,), jnp.float32)
    return gamma, beta, mean, var


def init_raw_params(key, num_inputs):
    ks = jax.random.split(key, 12)
    raw = {
        "conv0": _init_conv(ks[0], num_inputs, 18), "bn0": _init_bn(ks[1], 18),
        "conv1": _init_conv(ks[2], 18, 16),         "bn1": _init_bn(ks[3], 16),
        "conv2": _init_conv(ks[4], 16, 14),         "bn2": _init_bn(ks[5], 14),
        "convt3": _init_convT(ks[6], 14, 16),       "bn3": _init_bn(ks[7], 16),
        "convt4": _init_convT(ks[8], 16, 18),       "bn4": _init_bn(ks[9], 18),
        "convt5": _init_convT(ks[10], 18, 19),      "bn5": _init_bn(ks[11], 19),
    }
    return jax.tree_util.tree_map(lambda a: np.asarray(a, np.float32), raw)


# ============================================================================
# Plain numpy reference (mirrors the PyTorch ops literally) for self-check
# ============================================================================
def _np_conv1d(x, w, b, padding=1):
    N, Cin, L = x.shape
    Cout, _, K = w.shape
    xp = np.pad(x, ((0, 0), (0, 0), (padding, padding)))
    Lout = L + 2 * padding - K + 1
    out = np.zeros((N, Cout, Lout), np.float32)
    for l in range(Lout):
        out[:, :, l] = np.einsum('nck,ock->no', xp[:, :, l:l + K], w)
    return out + b[None, :, None]


def _np_convtranspose1d(x, w, b, stride, padding, output_padding):
    N, Cin, L = x.shape
    _, Cout, K = w.shape
    Lout = (L - 1) * stride - 2 * padding + K + output_padding
    out = np.zeros((N, Cout, Lout), np.float32)
    for i in range(L):
        for k in range(K):
            j = i * stride - padding + k
            if 0 <= j < Lout:
                out[:, :, j] += np.einsum('nc,co->no', x[:, :, i], w[:, :, k])
    return out + b[None, :, None]


def _np_avgpool1d(x, kernel=3, stride=2, padding=1):
    N, C, L = x.shape
    xp = np.pad(x, ((0, 0), (0, 0), (padding, padding)))
    Lout = (L + 2 * padding - kernel) // stride + 1
    out = np.zeros((N, C, Lout), np.float32)
    for l in range(Lout):
        out[:, :, l] = xp[:, :, l * stride:l * stride + kernel].mean(axis=2)
    return out


def _np_bn_relu(x, gamma, beta, mean, var, eps=1e-5):
    scale = gamma / np.sqrt(var + eps)
    shift = beta - mean * scale
    return np.maximum(x * scale[None, :, None] + shift[None, :, None], 0.0)


def reference_forward(x, raw):
    x = np.asarray(x, np.float32)
    x = _np_bn_relu(_np_conv1d(x, *raw["conv0"]), *raw["bn0"])
    x = _np_bn_relu(_np_avgpool1d(_np_conv1d(x, *raw["conv1"])), *raw["bn1"])
    x = _np_bn_relu(_np_avgpool1d(_np_conv1d(x, *raw["conv2"])), *raw["bn2"])
    x = _np_bn_relu(_np_convtranspose1d(x, *raw["convt3"], 2, 1, 1), *raw["bn3"])
    x = _np_bn_relu(_np_convtranspose1d(x, *raw["convt4"], 2, 1, 1), *raw["bn4"])
    x = _np_bn_relu(_np_convtranspose1d(x, *raw["convt5"], 1, 1, 0), *raw["bn5"])
    return x


# ============================================================================
if __name__ == "__main__":
    key = jax.random.PRNGKey(0)
    k_x, k_p = jax.random.split(key)

    N, num_inputs, L = 2, 4, 16          # batch=2, num_inputs=4, history_signal=16
    x = jax.random.normal(k_x, (N, num_inputs, L), jnp.float32)

    raw = init_raw_params(k_p, num_inputs)
    slab, off, dims = build_operands(raw, L, N)
    L4 = dims[-1]

    y_ref = reference_forward(np.asarray(x), raw)

    y, last_err = None, None
    # Prefer stride-2 row stores for the ConvT interleave; if that path does
    # not lower/verify on this toolchain, fall back to tiny interleave matmuls.
    for strided in (True, False):
        try:
            fwd = jax.jit(make_forward(tuple(slab.shape), off, dims, N,
                                       num_inputs, strided_interleave=strided))
            y_try = jax.block_until_ready(fwd(x, slab))
            assert y_try.shape == (N, 19, L4), y_try.shape
            assert bool(jnp.all(jnp.isfinite(y_try)))
            np.testing.assert_allclose(np.asarray(y_try), y_ref,
                                       atol=1e-3, rtol=1e-3)
            y = y_try
            break
        except Exception as e:  # noqa: BLE001
            last_err = e
    if y is None:
        raise last_err

    print("KERNEL_OK")
</pallas_src>

<mosaic_0001>
module attributes {stable_mosaic.version = 11 : i64} {
  func.func @kernel(%arg0: i32, %arg1: memref<32x32xf32, #tpu.memory_space<vmem>>, %arg2: memref<848x32xf32, #tpu.memory_space<vmem>>, %arg3: memref<32x32xf32, #tpu.memory_space<vmem>>, %arg4: memref<32x32xf32, #tpu.memory_space<vmem>>, %arg5: memref<16x32xf32, #tpu.memory_space<vmem>>, %arg6: memref<32x32xf32, #tpu.memory_space<vmem>>) attributes {dimension_semantics = [#tpu.dimension_semantics<arbitrary>], iteration_bounds = array<i64: 1>, scalar_prefetch = 0 : i64, scratch_operands = 3 : i64, tpu.core_type = #tpu.core_type<tc>, window_params = [{pipeline_mode = #tpu.pipeline_mode<synchronous>, transform_indices = @transform_0, window_bounds = array<i64: 32, 32>}, {pipeline_mode = #tpu.pipeline_mode<synchronous>, transform_indices = @transform_1, window_bounds = array<i64: 848, 32>}, {pipeline_mode = #tpu.pipeline_mode<synchronous>, transform_indices = @transform_2, window_bounds = array<i64: 32, 32>}]} {
    %c0 = arith.constant 0 : index
    %c0_0 = arith.constant 0 : index
    %0 = vector.load %arg1[%c0, %c0_0] : memref<32x32xf32, #tpu.memory_space<vmem>>, vector<32x32xf32>
    %c1_i32 = arith.constant 1 : i32
    %1 = tpu.dynamic_rotate %0 by %c1_i32 dim 0 : vector<32x32xf32>, i32 -> vector<32x32xf32>
    %c48 = arith.constant 48 : index
    %c0_1 = arith.constant 0 : index
    %2 = vector.load %arg2[%c48, %c0_1] : memref<848x32xf32, #tpu.memory_space<vmem>>, vector<32x32xf32>
    %3 = arith.mulf %1, %2 : vector<32x32xf32>
    %c112 = arith.constant 112 : index
    %c0_2 = arith.constant 0 : index
    %4 = vector.load %arg2[%c112, %c0_2] : memref<848x32xf32, #tpu.memory_space<vmem>>, vector<32x32xf32>
    %cst = arith.constant dense<0.000000e+00> : vector<32x32xf32>
    %5 = tpu.matmul %3, %4, %cst {dimension_numbers = #tpu.dot_dimension_numbers<[1], [0], [0], [1], [0, 0, 1, 1], [], []>} : vector<32x32xf32>, vector<32x32xf32>, vector<32x32xf32> -> vector<32x32xf32>
    %c144 = arith.constant 144 : index
    %c0_3 = arith.constant 0 : index
    %6 = vector.load %arg2[%c144, %c0_3] : memref<848x32xf32, #tpu.memory_space<vmem>>, vector<32x32xf32>
    %cst_4 = arith.constant dense<0.000000e+00> : vector<32x32xf32>
    %7 = tpu.matmul %0, %6, %cst_4 {dimension_numbers = #tpu.dot_dimension_numbers<[1], [0], [0], [1], [0, 0, 1, 1], [], []>} : vector<32x32xf32>, vector<32x32xf32>, vector<32x32xf32> -> vector<32x32xf32>
    %8 = arith.addf %5, %7 : vector<32x32xf32>
    %c31_i32 = arith.constant 31 : i32
    %9 = tpu.dynamic_rotate %0 by %c31_i32 dim 0 : vector<32x32xf32>, i32 -> vector<32x32xf32>
    %c80 = arith.constant 80 : index
    %c0_5 = arith.constant 0 : index
    %10 = vector.load %arg2[%c80, %c0_5] : memref<848x32xf32, #tpu.memory_space<vmem>>, vector<32x32xf32>
    %11 = arith.mulf %9, %10 : vector<32x32xf32>
    %c176 = arith.constant 176 : index
    %c0_6 = arith.constant 0 : index
    %12 = vector.load %arg2[%c176, %c0_6] : memref<848x32xf32, #tpu.memory_space<vmem>>, vector<32x32xf32>
    %cst_7 = arith.constant dense<0.000000e+00> : vector<32x32xf32>
    %13 = tpu.matmul %11, %12, %cst_7 {dimension_numbers = #tpu.dot_dimension_numbers<[1], [0], [0], [1], [0, 0, 1, 1], [], []>} : vector<32x32xf32>, vector<32x32xf32>, vector<32x32xf32> -> vector<32x32xf32>
    %14 = arith.addf %8, %13 : vector<32x32xf32>
    %c208 = arith.constant 208 : index
    %c0_8 = arith.constant 0 : index
    %15 = vector.load %arg2[%c208, %c0_8] : memref<848x32xf32, #tpu.memory_space<vmem>>, vector<1x32xf32>
    %16 = vector.broadcast %15 : vector<1x32xf32> to vector<32x32xf32>
    %17 = arith.addf %14, %16 : vector<32x32xf32>
    %cst_9 = arith.constant 0.000000e+00 : f32
    %18 = vector.broadcast %cst_9 : f32 to vector<32x32xf32>
    %19 = arith.maximumf %17, %18 : vector<32x32xf32>
    %c1_i32_10 = arith.constant 1 : i32
    %20 = tpu.dynamic_rotate %19 by %c1_i32_10 dim 0 : vector<32x32xf32>, i32 -> vector<32x32xf32>
    %21 = arith.mulf %20, %2 : vector<32x32xf32>
    %c216 = arith.constant 216 : index
    %c0_11 = arith.constant 0 : index
    %22 = vector.load %arg2[%c216, %c0_11] : memref<848x32xf32, #tpu.memory_space<vmem>>, vector<32x32xf32>
    %cst_12 = arith.constant dense<0.000000e+00> : vector<32x32xf32>
    %23 = tpu.matmul %21, %22, %cst_12 {dimension_numbers = #tpu.dot_dimension_numbers<[1], [0], [0], [1], [0, 0, 1, 1], [], []>} : vector<32x32xf32>, vector<32x32xf32>, vector<32x32xf32> -> vector<32x32xf32>
    %c248 = arith.constant 248 : index
    %c0_13 = arith.constant 0 : index
    %24 = vector.load %arg2[%c248, %c0_13] : memref<848x32xf32, #tpu.memory_space<vmem>>, vector<32x32xf32>
    %cst_14 = arith.constant dense<0.000000e+00> : vector<32x32xf32>
    %25 = tpu.matmul %19, %24, %cst_14 {dimension_numbers = #tpu.dot_dimension_numbers<[1], [0], [0], [1], [0, 0, 1, 1], [], []>} : vector<32x32xf32>, vector<32x32xf32>, vector<32x32xf32> -> vector<32x32xf32>
    %26 = arith.addf %23, %25 : vector<32x32xf32>
    %c31_i32_15 = arith.constant 31 : i32
    %27 = tpu.dynamic_rotate %19 by %c31_i32_15 dim 0 : vector<32x32xf32>, i32 -> vector<32x32xf32>
    %28 = arith.mulf %27, %10 : vector<32x32xf32>
    %c280 = arith.constant 280 : index
    %c0_16 = arith.constant 0 : index
    %29 = vector.load %arg2[%c280, %c0_16] : memref<848x32xf32, #tpu.memory_space<vmem>>, vector<32x32xf32>
    %cst_17 = arith.constant dense<0.000000e+00> : vector<32x32xf32>
    %30 = tpu.matmul %28, %29, %cst_17 {dimension_numbers = #tpu.dot_dimension_numbers<[1], [0], [0], [1], [0, 0, 1, 1], [], []>} : vector<32x32xf32>, vector<32x32xf32>, vector<32x32xf32> -> vector<32x32xf32>
    %31 = arith.addf %26, %30 : vector<32x32xf32>
    %c312 = arith.constant 312 : index
    %c0_18 = arith.constant 0 : index
    %32 = vector.load %arg2[%c312, %c0_18] : memref<848x32xf32, #tpu.memory_space<vmem>>, vector<1x32xf32>
    %33 = vector.broadcast %32 : vector<1x32xf32> to vector<32x32xf32>
    %34 = arith.addf %31, %33 : vector<32x32xf32>
    %c0_19 = arith.constant 0 : index
    %c0_20 = arith.constant 0 : index
    %35 = vector.load %arg4[%c0_19, %c0_20] : memref<32x32xf32, #tpu.memory_space<vmem>>, vector<32x32xf32>
    tpu.vector_store %arg4[%c0_19, %c0_20], %34 {strides = array<i32>} : memref<32x32xf32, #tpu.memory_space<vmem>>, vector<32x32xf32>,
    %c0_21 = arith.constant 0 : index
    %c0_22 = arith.constant 0 : index
    %36 = tpu.strided_load %arg4[%c0_21, %c0_22] {strides = array<i32: 2, 1>} : memref<32x32xf32, #tpu.memory_space<vmem>>, vector<16x32xf32>
    %c1 = arith.constant 1 : index
    %c0_23 = arith.constant 0 : index
    %37 = tpu.strided_load %arg4[%c1, %c0_23] {strides = array<i32: 2, 1>} : memref<32x32xf32, #tpu.memory_space<vmem>>, vector<16x32xf32>
    %c1_i32_24 = arith.constant 1 : i32
    %38 = tpu.dynamic_rotate %37 by %c1_i32_24 dim 0 : vector<16x32xf32>, i32 -> vector<16x32xf32>
    %c16 = arith.constant 16 : index
    %c0_25 = arith.constant 0 : index
    %39 = vector.load %arg2[%c16, %c0_25] : memref<848x32xf32, #tpu.memory_space<vmem>>, vector<16x32xf32>
    %40 = arith.mulf %38, %39 : vector<16x32xf32>
    %41 = arith.addf %36, %37 : vector<16x32xf32>
    %42 = arith.addf %41, %40 : vector<16x32xf32>
    %cst_26 = arith.constant 0.333333343 : f32
    %43 = vector.broadcast %cst_26 : f32 to vector<16x32xf32>
    %44 = arith.mulf %42, %43 : vector<16x32xf32>
    %c320 = arith.constant 320 : index
    %c0_27 = arith.constant 0 : index
    %45 = vector.load %arg2[%c320, %c0_27] : memref<848x32xf32, #tpu.memory_space<vmem>>, vector<1x32xf32>
    %46 = vector.broadcast %45 : vector<1x32xf32> to vector<16x32xf32>
    %47 = arith.addf %44, %46 : vector<16x32xf32>
    %cst_28 = arith.constant 0.000000e+00 : f32
    %48 = vector.broadcast %cst_28 : f32 to vector<16x32xf32>
    %49 = arith.maximumf %47, %48 : vector<16x32xf32>
    %c1_i32_29 = arith.constant 1 : i32
    %50 = tpu.dynamic_rotate %49 by %c1_i32_29 dim 0 : vector<16x32xf32>, i32 -> vector<16x32xf32>
    %51 = arith.mulf %50, %39 : vector<16x32xf32>
    %c328 = arith.constant 328 : index
    %c0_30 = arith.constant 0 : index
    %52 = vector.load %arg2[%c328, %c0_30] : memref<848x32xf32, #tpu.memory_space<vmem>>, vector<32x32xf32>
    %cst_31 = arith.constant dense<0.000000e+00> : vector<16x32xf32>
    %53 = tpu.matmul %51, %52, %cst_31 {dimension_numbers = #tpu.dot_dimension_numbers<[1], [0], [0], [1], [0, 0, 1, 1], [], []>} : vector<16x32xf32>, vector<32x32xf32>, vector<16x32xf32> -> vector<16x32xf32>
    %c360 = arith.constant 360 : index
    %c0_32 = arith.constant 0 : index
    %54 = vector.load %arg2[%c360, %c0_32] : memref<848x32xf32, #tpu.memory_space<vmem>>, vector<32x32xf32>
    %cst_33 = arith.constant dense<0.000000e+00> : vector<16x32xf32>
    %55 = tpu.matmul %49, %54, %cst_33 {dimension_numbers = #tpu.dot_dimension_numbers<[1], [0], [0], [1], [0, 0, 1, 1], [], []>} : vector<16x32xf32>, vector<32x32xf32>, vector<16x32xf32> -> vector<16x32xf32>
    %56 = arith.addf %53, %55 : vector<16x32xf32>
    %c15_i32 = arith.constant 15 : i32
    %57 = tpu.dynamic_rotate %49 by %c15_i32 dim 0 : vector<16x32xf32>, i32 -> vector<16x32xf32>
    %c32 = arith.constant 32 : index
    %c0_34 = arith.constant 0 : index
    %58 = vector.load %arg2[%c32, %c0_34] : memref<848x32xf32, #tpu.memory_space<vmem>>, vector<16x32xf32>
    %59 = arith.mulf %57, %58 : vector<16x32xf32>
    %c392 = arith.constant 392 : index
    %c0_35 = arith.constant 0 : index
    %60 = vector.load %arg2[%c392, %c0_35] : memref<848x32xf32, #tpu.memory_space<vmem>>, vector<32x32xf32>
    %cst_36 = arith.constant dense<0.000000e+00> : vector<16x32xf32>
    %61 = tpu.matmul %59, %60, %cst_36 {dimension_numbers = #tpu.dot_dimension_numbers<[1], [0], [0], [1], [0, 0, 1, 1], [], []>} : vector<16x32xf32>, vector<32x32xf32>, vector<16x32xf32> -> vector<16x32xf32>
    %62 = arith.addf %56, %61 : vector<16x32xf32>
    %c424 = arith.constant 424 : index
    %c0_37 = arith.constant 0 : index
    %63 = vector.load %arg2[%c424, %c0_37] : memref<848x32xf32, #tpu.memory_space<vmem>>, vector<1x32xf32>
    %64 = vector.broadcast %63 : vector<1x32xf32> to vector<16x32xf32>
    %65 = arith.addf %62, %64 : vector<16x32xf32>
    %c0_38 = arith.constant 0 : index
    %c0_39 = arith.constant 0 : index
    %66 = vector.load %arg4[%c0_38, %c0_39] : memref<32x32xf32, #tpu.memory_space<vmem>>, vector<16x32xf32>
    tpu.vector_store %arg4[%c0_38, %c0_39], %65 {strides = array<i32>} : memref<32x32xf32, #tpu.memory_space<vmem>>, vector<16x32xf32>,
    %c0_40 = arith.constant 0 : index
    %c0_41 = arith.constant 0 : index
    %67 = tpu.strided_load %arg4[%c0_40, %c0_41] {strides = array<i32: 2, 1>} : memref<32x32xf32, #tpu.memory_space<vmem>>, vector<8x32xf32>
    %c1_42 = arith.constant 1 : index
    %c0_43 = arith.constant 0 : index
    %68 = tpu.strided_load %arg4[%c1_42, %c0_43] {strides = array<i32: 2, 1>} : memref<32x32xf32, #tpu.memory_space<vmem>>, vector<8x32xf32>
    %c1_i32_44 = arith.constant 1 : i32
    %69 = tpu.dynamic_rotate %68 by %c1_i32_44 dim 0 : vector<8x32xf32>, i32 -> vector<8x32xf32>
    %c0_45 = arith.constant 0 : index
    %c0_46 = arith.constant 0 : index
    %70 = vector.load %arg2[%c0_45, %c0_46] : memref<848x32xf32, #tpu.memory_space<vmem>>, vector<8x32xf32>
    %71 = arith.mulf %69, %70 : vector<8x32xf32>
    %72 = arith.addf %67, %68 : vector<8x32xf32>
    %73 = arith.addf %72, %71 : vector<8x32xf32>
    %cst_47 = arith.constant 0.333333343 : f32
    %74 = vector.broadcast %cst_47 : f32 to vector<8x32xf32>
    %75 = arith.mulf %73, %74 : vector<8x32xf32>
    %c432 = arith.constant 432 : index
    %c0_48 = arith.constant 0 : index
    %76 = vector.load %arg2[%c432, %c0_48] : memref<848x32xf32, #tpu.memory_space<vmem>>, vector<1x32xf32>
    %77 = vector.broadcast %76 : vector<1x32xf32> to vector<8x32xf32>
    %78 = arith.addf %75, %77 : vector<8x32xf32>
    %cst_49 = arith.constant 0.000000e+00 : f32
    %79 = vector.broadcast %cst_49 : f32 to vector<8x32xf32>
    %80 = arith.maximumf %78, %79 : vector<8x32xf32>
    %c472 = arith.constant 472 : index
    %c0_50 = arith.constant 0 : index
    %81 = vector.load %arg2[%c472, %c0_50] : memref<848x32xf32, #tpu.memory_space<vmem>>, vector<32x32xf32>
    %cst_51 = arith.constant dense<0.000000e+00> : vector<8x32xf32>
    %82 = tpu.matmul %80, %81, %cst_51 {dimension_numbers = #tpu.dot_dimension_numbers<[1], [0], [0], [1], [0, 0, 1, 1], [], []>} : vector<8x32xf32>, vector<32x32xf32>, vector<8x32xf32> -> vector<8x32xf32>
    %c504 = arith.constant 504 : index
    %c0_52 = arith.constant 0 : index
    %83 = vector.load %arg2[%c504, %c0_52] : memref<848x32xf32, #tpu.memory_space<vmem>>, vector<32x32xf32>
    %cst_53 = arith.constant dense<0.000000e+00> : vector<8x32xf32>
    %84 = tpu.matmul %80, %83, %cst_53 {dimension_numbers = #tpu.dot_dimension_numbers<[1], [0], [0], [1], [0, 0, 1, 1], [], []>} : vector<8x32xf32>, vector<32x32xf32>, vector<8x32xf32> -> vector<8x32xf32>
    %c7_i32 = arith.constant 7 : i32
    %85 = tpu.dynamic_rotate %80 by %c7_i32 dim 0 : vector<8x32xf32>, i32 -> vector<8x32xf32>
    %c8 = arith.constant 8 : index
    %c0_54 = arith.constant 0 : index
    %86 = vector.load %arg2[%c8, %c0_54] : memref<848x32xf32, #tpu.memory_space<vmem>>, vector<8x32xf32>
    %87 = arith.mulf %85, %86 : vector<8x32xf32>
    %c440 = arith.constant 440 : index
    %c0_55 = arith.constant 0 : index
    %88 = vector.load %arg2[%c440, %c0_55] : memref<848x32xf32, #tpu.memory_space<vmem>>, vector<32x32xf32>
    %cst_56 = arith.constant dense<0.000000e+00> : vector<8x32xf32>
    %89 = tpu.matmul %87, %88, %cst_56 {dimension_numbers = #tpu.dot_dimension_numbers<[1], [0], [0], [1], [0, 0, 1, 1], [], []>} : vector<8x32xf32>, vector<32x32xf32>, vector<8x32xf32> -> vector<8x32xf32>
    %90 = arith.addf %84, %89 : vector<8x32xf32>
    %c0_57 = arith.constant 0 : index
    %c0_58 = arith.constant 0 : index
    %91 = tpu.strided_load %arg5[%c0_57, %c0_58] {strides = array<i32: 2, 1>} : memref<16x32xf32, #tpu.memory_space<vmem>>, vector<8x32xf32>
    tpu.strided_store %arg5[%c0_57, %c0_58], %82 {strides = array<i32: 2, 1>} : memref<16x32xf32, #tpu.memory_space<vmem>>, vector<8x32xf32>
    %c1_59 = arith.constant 1 : index
    %c0_60 = arith.constant 0 : index
    %92 = tpu.strided_load %arg5[%c1_59, %c0_60] {strides = array<i32: 2, 1>} : memref<16x32xf32, #tpu.memory_space<vmem>>, vector<8x32xf32>
    tpu.strided_store %arg5[%c1_59, %c0_60], %90 {strides = array<i32: 2, 1>} : memref<16x32xf32, #tpu.memory_space<vmem>>, vector<8x32xf32>
    %c0_61 = arith.constant 0 : index
    %c0_62 = arith.constant 0 : index
    %93 = vector.load %arg5[%c0_61, %c0_62] : memref<16x32xf32, #tpu.memory_space<vmem>>, vector<16x32xf32>
    %c536 = arith.constant 536 : index
    %c0_63 = arith.constant 0 : index
    %94 = vector.load %arg2[%c536, %c0_63] : memref<848x32xf32, #tpu.memory_space<vmem>>, vector<1x32xf32>
    %95 = vector.broadcast %94 : vector<1x32xf32> to vector<16x32xf32>
    %96 = arith.addf %93, %95 : vector<16x32xf32>
    %cst_64 = arith.constant 0.000000e+00 : f32
    %97 = vector.broadcast %cst_64 : f32 to vector<16x32xf32>
    %98 = arith.maximumf %96, %97 : vector<16x32xf32>
    %c576 = arith.constant 576 : index
    %c0_65 = arith.constant 0 : index
    %99 = vector.load %arg2[%c576, %c0_65] : memref<848x32xf32, #tpu.memory_space<vmem>>, vector<32x32xf32>
    %cst_66 = arith.constant dense<0.000000e+00> : vector<16x32xf32>
    %100 = tpu.matmul %98, %99, %cst_66 {dimension_numbers = #tpu.dot_dimension_numbers<[1], [0], [0], [1], [0, 0, 1, 1], [], []>} : vector<16x32xf32>, vector<32x32xf32>, vector<16x32xf32> -> vector<16x32xf32>
    %c608 = arith.constant 608 : index
    %c0_67 = arith.constant 0 : index
    %101 = vector.load %arg2[%c608, %c0_67] : memref<848x32xf32, #tpu.memory_space<vmem>>, vector<32x32xf32>
    %cst_68 = arith.constant dense<0.000000e+00> : vector<16x32xf32>
    %102 = tpu.matmul %98, %101, %cst_68 {dimension_numbers = #tpu.dot_dimension_numbers<[1], [0], [0], [1], [0, 0, 1, 1], [], []>} : vector<16x32xf32>, vector<32x32xf32>, vector<16x32xf32> -> vector<16x32xf32>
    %c15_i32_69 = arith.constant 15 : i32
    %103 = tpu.dynamic_rotate %98 by %c15_i32_69 dim 0 : vector<16x32xf32>, i32 -> vector<16x32xf32>
    %104 = arith.mulf %103, %58 : vector<16x32xf32>
    %c544 = arith.constant 544 : index
    %c0_70 = arith.constant 0 : index
    %105 = vector.load %arg2[%c544, %c0_70] : memref<848x32xf32, #tpu.memory_space<vmem>>, vector<32x32xf32>
    %cst_71 = arith.constant dense<0.000000e+00> : vector<16x32xf32>
    %106 = tpu.matmul %104, %105, %cst_71 {dimension_numbers = #tpu.dot_dimension_numbers<[1], [0], [0], [1], [0, 0, 1, 1], [], []>} : vector<16x32xf32>, vector<32x32xf32>, vector<16x32xf32> -> vector<16x32xf32>
    %107 = arith.addf %102, %106 : vector<16x32xf32>
    %c0_72 = arith.constant 0 : index
    %c0_73 = arith.constant 0 : index
    %108 = tpu.strided_load %arg6[%c0_72, %c0_73] {strides = array<i32: 2, 1>} : memref<32x32xf32, #tpu.memory_space<vmem>>, vector<16x32xf32>
    tpu.strided_store %arg6[%c0_72, %c0_73], %100 {strides = array<i32: 2, 1>} : memref<32x32xf32, #tpu.memory_space<vmem>>, vector<16x32xf32>
    %c1_74 = arith.constant 1 : index
    %c0_75 = arith.constant 0 : index
    %109 = tpu.strided_load %arg6[%c1_74, %c0_75] {strides = array<i32: 2, 1>} : memref<32x32xf32, #tpu.memory_space<vmem>>, vector<16x32xf32>
    tpu.strided_store %arg6[%c1_74, %c0_75], %107 {strides = array<i32: 2, 1>} : memref<32x32xf32, #tpu.memory_space<vmem>>, vector<16x32xf32>
    %c0_76 = arith.constant 0 : index
    %c0_77 = arith.constant 0 : index
    %110 = vector.load %arg6[%c0_76, %c0_77] : memref<32x32xf32, #tpu.memory_space<vmem>>, vector<32x32xf32>
    %c640 = arith.constant 640 : index
    %c0_78 = arith.constant 0 : index
    %111 = vector.load %arg2[%c640, %c0_78] : memref<848x32xf32, #tpu.memory_space<vmem>>, vector<1x32xf32>
    %112 = vector.broadcast %111 : vector<1x32xf32> to vector<32x32xf32>
    %113 = arith.addf %110, %112 : vector<32x32xf32>
    %cst_79 = arith.constant 0.000000e+00 : f32
    %114 = vector.broadcast %cst_79 : f32 to vector<32x32xf32>
    %115 = arith.maximumf %113, %114 : vector<32x32xf32>
    %c1_i32_80 = arith.constant 1 : i32
    %116 = tpu.dynamic_rotate %115 by %c1_i32_80 dim 0 : vector<32x32xf32>, i32 -> vector<32x32xf32>
    %117 = arith.mulf %116, %2 : vector<32x32xf32>
    %c648 = arith.constant 648 : index
    %c0_81 = arith.constant 0 : index
    %118 = vector.load %arg2[%c648, %c0_81] : memref<848x32xf32, #tpu.memory_space<vmem>>, vector<32x32xf32>
    %cst_82 = arith.constant dense<0.000000e+00> : vector<32x32xf32>
    %119 = tpu.matmul %117, %118, %cst_82 {dimension_numbers = #tpu.dot_dimension_numbers<[1], [0], [0], [1], [0, 0, 1, 1], [], []>} : vector<32x32xf32>, vector<32x32xf32>, vector<32x32xf32> -> vector<32x32xf32>
    %c680 = arith.constant 680 : index
    %c0_83 = arith.constant 0 : index
    %120 = vector.load %arg2[%c680, %c0_83] : memref<848x32xf32, #tpu.memory_space<vmem>>, vector<32x32xf32>
    %cst_84 = arith.constant dense<0.000000e+00> : vector<32x32xf32>
    %121 = tpu.matmul %115, %120, %cst_84 {dimension_numbers = #tpu.dot_dimension_numbers<[1], [0], [0], [1], [0, 0, 1, 1], [], []>} : vector<32x32xf32>, vector<32x32xf32>, vector<32x32xf32> -> vector<32x32xf32>
    %122 = arith.addf %119, %121 : vector<32x32xf32>
    %c31_i32_85 = arith.constant 31 : i32
    %123 = tpu.dynamic_rotate %115 by %c31_i32_85 dim 0 : vector<32x32xf32>, i32 -> vector<32x32xf32>
    %124 = arith.mulf %123, %10 : vector<32x32xf32>
    %c712 = arith.constant 712 : index
    %c0_86 = arith.constant 0 : index
    %125 = vector.load %arg2[%c712, %c0_86] : memref<848x32xf32, #tpu.memory_space<vmem>>, vector<32x32xf32>
    %cst_87 = arith.constant dense<0.000000e+00> : vector<32x32xf32>
    %126 = tpu.matmul %124, %125, %cst_87 {dimension_numbers = #tpu.dot_dimension_numbers<[1], [0], [0], [1], [0, 0, 1, 1], [], []>} : vector<32x32xf32>, vector<32x32xf32>, vector<32x32xf32> -> vector<32x32xf32>
    %127 = arith.addf %122, %126 : vector<32x32xf32>
    %c744 = arith.constant 744 : index
    %c0_88 = arith.constant 0 : index
    %128 = vector.load %arg2[%c744, %c0_88] : memref<848x32xf32, #tpu.memory_space<vmem>>, vector<1x32xf32>
    %129 = vector.broadcast %128 : vector<1x32xf32> to vector<32x32xf32>
    %130 = arith.addf %127, %129 : vector<32x32xf32>
    %cst_89 = arith.constant 0.000000e+00 : f32
    %131 = vector.broadcast %cst_89 : f32 to vector<32x32xf32>
    %132 = arith.maximumf %130, %131 : vector<32x32xf32>
    %c0_90 = arith.constant 0 : index
    %c0_91 = arith.constant 0 : index
    %133 = vector.load %arg3[%c0_90, %c0_91] : memref<32x32xf32, #tpu.memory_space<vmem>>, vector<32x32xf32>
    tpu.vector_store %arg3[%c0_90, %c0_91], %132 {strides = array<i32>} : memref<32x32xf32, #tpu.memory_space<vmem>>, vector<32x32xf32>,
    return
  }
  func.func @transform_0(%arg0: i32) -> (i32, i32) {
    %c0_i32 = arith.constant 0 : i32
    %c0_i32_0 = arith.constant 0 : i32
    %c0_i32_1 = arith.constant 0 : i32
    return %c0_i32, %c0_i32_0 : i32, i32
  }
  func.func @transform_1(%arg0: i32) -> (i32, i32) {
    %c0_i32 = arith.constant 0 : i32
    %c0_i32_0 = arith.constant 0 : i32
    %c0_i32_1 = arith.constant 0 : i32
    return %c0_i32, %c0_i32_0 : i32, i32
  }
  func.func @transform_2(%arg0: i32) -> (i32, i32) {
    %c0_i32 = arith.constant 0 : i32
    %c0_i32_0 = arith.constant 0 : i32
    %c0_i32_1 = arith.constant 0 : i32
    return %c0_i32, %c0_i32_0 : i32, i32
  }
}

module attributes {stable_mosaic.version = 11 : i64} {
  func.func @kernel(%arg0: i32, %arg1: memref<32x32xf32, #tpu.memory_space<vmem>>, %arg2: memref<848x32xf32, #tpu.memory_space<vmem>>, %arg3: memref<32x32xf32, #tpu.memory_space<vmem>>, %arg4: memref<32x32xf32, #tpu.memory_space<vmem>>, %arg5: memref<16x32xf32, #tpu.memory_space<vmem>>, %arg6: memref<32x32xf32, #tpu.memory_space<vmem>>) attributes {dimension_semantics = [#tpu.dimension_semantics<arbitrary>], iteration_bounds = array<i64: 1>, scalar_prefetch = 0 : i64, scratch_operands = 3 : i64, tpu.core_type = #tpu.core_type<tc>, window_params = [{pipeline_mode = #tpu.pipeline_mode<synchronous>, transform_indices = @transform_0, window_bounds = array<i64: 32, 32>}, {pipeline_mode = #tpu.pipeline_mode<synchronous>, transform_indices = @transform_1, window_bounds = array<i64: 848, 32>}, {pipeline_mode = #tpu.pipeline_mode<synchronous>, transform_indices = @transform_2, window_bounds = array<i64: 32, 32>}]} {
    %c0 = arith.constant 0 : index
    %c0_0 = arith.constant 0 : index
    %0 = vector.load %arg1[%c0, %c0_0] : memref<32x32xf32, #tpu.memory_space<vmem>>, vector<32x32xf32>
    %c1_i32 = arith.constant 1 : i32
    %1 = tpu.dynamic_rotate %0 by %c1_i32 dim 0 : vector<32x32xf32>, i32 -> vector<32x32xf32>
    %c48 = arith.constant 48 : index
    %c0_1 = arith.constant 0 : index
    %2 = vector.load %arg2[%c48, %c0_1] : memref<848x32xf32, #tpu.memory_space<vmem>>, vector<32x32xf32>
    %3 = arith.mulf %1, %2 : vector<32x32xf32>
    %c112 = arith.constant 112 : index
    %c0_2 = arith.constant 0 : index
    %4 = vector.load %arg2[%c112, %c0_2] : memref<848x32xf32, #tpu.memory_space<vmem>>, vector<32x32xf32>
    %cst = arith.constant dense<0.000000e+00> : vector<32x32xf32>
    %5 = tpu.matmul %3, %4, %cst {dimension_numbers = #tpu.dot_dimension_numbers<[1], [0], [0], [1], [0, 0, 1, 1], [], []>} : vector<32x32xf32>, vector<32x32xf32>, vector<32x32xf32> -> vector<32x32xf32>
    %c144 = arith.constant 144 : index
    %c0_3 = arith.constant 0 : index
    %6 = vector.load %arg2[%c144, %c0_3] : memref<848x32xf32, #tpu.memory_space<vmem>>, vector<32x32xf32>
    %cst_4 = arith.constant dense<0.000000e+00> : vector<32x32xf32>
    %7 = tpu.matmul %0, %6, %cst_4 {dimension_numbers = #tpu.dot_dimension_numbers<[1], [0], [0], [1], [0, 0, 1, 1], [], []>} : vector<32x32xf32>, vector<32x32xf32>, vector<32x32xf32> -> vector<32x32xf32>
    %8 = arith.addf %5, %7 : vector<32x32xf32>
    %c31_i32 = arith.constant 31 : i32
    %9 = tpu.dynamic_rotate %0 by %c31_i32 dim 0 : vector<32x32xf32>, i32 -> vector<32x32xf32>
    %c80 = arith.constant 80 : index
    %c0_5 = arith.constant 0 : index
    %10 = vector.load %arg2[%c80, %c0_5] : memref<848x32xf32, #tpu.memory_space<vmem>>, vector<32x32xf32>
    %11 = arith.mulf %9, %10 : vector<32x32xf32>
    %c176 = arith.constant 176 : index
    %c0_6 = arith.constant 0 : index
    %12 = vector.load %arg2[%c176, %c0_6] : memref<848x32xf32, #tpu.memory_space<vmem>>, vector<32x32xf32>
    %cst_7 = arith.constant dense<0.000000e+00> : vector<32x32xf32>
    %13 = tpu.matmul %11, %12, %cst_7 {dimension_numbers = #tpu.dot_dimension_numbers<[1], [0], [0], [1], [0, 0, 1, 1], [], []>} : vector<32x32xf32>, vector<32x32xf32>, vector<32x32xf32> -> vector<32x32xf32>
    %14 = arith.addf %8, %13 : vector<32x32xf32>
    %c208 = arith.constant 208 : index
    %c0_8 = arith.constant 0 : index
    %15 = vector.load %arg2[%c208, %c0_8] : memref<848x32xf32, #tpu.memory_space<vmem>>, vector<1x32xf32>
    %16 = vector.broadcast %15 : vector<1x32xf32> to vector<32x32xf32>
    %17 = arith.addf %14, %16 : vector<32x32xf32>
    %cst_9 = arith.constant 0.000000e+00 : f32
    %18 = vector.broadcast %cst_9 : f32 to vector<32x32xf32>
    %19 = arith.maximumf %17, %18 : vector<32x32xf32>
    %c1_i32_10 = arith.constant 1 : i32
    %20 = tpu.dynamic_rotate %19 by %c1_i32_10 dim 0 : vector<32x32xf32>, i32 -> vector<32x32xf32>
    %21 = arith.mulf %20, %2 : vector<32x32xf32>
    %c216 = arith.constant 216 : index
    %c0_11 = arith.constant 0 : index
    %22 = vector.load %arg2[%c216, %c0_11] : memref<848x32xf32, #tpu.memory_space<vmem>>, vector<32x32xf32>
    %cst_12 = arith.constant dense<0.000000e+00> : vector<32x32xf32>
    %23 = tpu.matmul %21, %22, %cst_12 {dimension_numbers = #tpu.dot_dimension_numbers<[1], [0], [0], [1], [0, 0, 1, 1], [], []>} : vector<32x32xf32>, vector<32x32xf32>, vector<32x32xf32> -> vector<32x32xf32>
    %c248 = arith.constant 248 : index
    %c0_13 = arith.constant 0 : index
    %24 = vector.load %arg2[%c248, %c0_13] : memref<848x32xf32, #tpu.memory_space<vmem>>, vector<32x32xf32>
    %cst_14 = arith.constant dense<0.000000e+00> : vector<32x32xf32>
    %25 = tpu.matmul %19, %24, %cst_14 {dimension_numbers = #tpu.dot_dimension_numbers<[1], [0], [0], [1], [0, 0, 1, 1], [], []>} : vector<32x32xf32>, vector<32x32xf32>, vector<32x32xf32> -> vector<32x32xf32>
    %26 = arith.addf %23, %25 : vector<32x32xf32>
    %c31_i32_15 = arith.constant 31 : i32
    %27 = tpu.dynamic_rotate %19 by %c31_i32_15 dim 0 : vector<32x32xf32>, i32 -> vector<32x32xf32>
    %28 = arith.mulf %27, %10 : vector<32x32xf32>
    %c280 = arith.constant 280 : index
    %c0_16 = arith.constant 0 : index
    %29 = vector.load %arg2[%c280, %c0_16] : memref<848x32xf32, #tpu.memory_space<vmem>>, vector<32x32xf32>
    %cst_17 = arith.constant dense<0.000000e+00> : vector<32x32xf32>
    %30 = tpu.matmul %28, %29, %cst_17 {dimension_numbers = #tpu.dot_dimension_numbers<[1], [0], [0], [1], [0, 0, 1, 1], [], []>} : vector<32x32xf32>, vector<32x32xf32>, vector<32x32xf32> -> vector<32x32xf32>
    %31 = arith.addf %26, %30 : vector<32x32xf32>
    %c312 = arith.constant 312 : index
    %c0_18 = arith.constant 0 : index
    %32 = vector.load %arg2[%c312, %c0_18] : memref<848x32xf32, #tpu.memory_space<vmem>>, vector<1x32xf32>
    %33 = vector.broadcast %32 : vector<1x32xf32> to vector<32x32xf32>
    %34 = arith.addf %31, %33 : vector<32x32xf32>
    %c0_19 = arith.constant 0 : index
    %c0_20 = arith.constant 0 : index
    %35 = vector.load %arg4[%c0_19, %c0_20] : memref<32x32xf32, #tpu.memory_space<vmem>>, vector<32x32xf32>
    tpu.vector_store %arg4[%c0_19, %c0_20], %34 {strides = array<i32>} : memref<32x32xf32, #tpu.memory_space<vmem>>, vector<32x32xf32>,
    %c0_21 = arith.constant 0 : index
    %c0_22 = arith.constant 0 : index
    %36 = tpu.strided_load %arg4[%c0_21, %c0_22] {strides = array<i32: 2, 1>} : memref<32x32xf32, #tpu.memory_space<vmem>>, vector<16x32xf32>
    %c1 = arith.constant 1 : index
    %c0_23 = arith.constant 0 : index
    %37 = tpu.strided_load %arg4[%c1, %c0_23] {strides = array<i32: 2, 1>} : memref<32x32xf32, #tpu.memory_space<vmem>>, vector<16x32xf32>
    %c1_i32_24 = arith.constant 1 : i32
    %38 = tpu.dynamic_rotate %37 by %c1_i32_24 dim 0 : vector<16x32xf32>, i32 -> vector<16x32xf32>
    %c16 = arith.constant 16 : index
    %c0_25 = arith.constant 0 : index
    %39 = vector.load %arg2[%c16, %c0_25] : memref<848x32xf32, #tpu.memory_space<vmem>>, vector<16x32xf32>
    %40 = arith.mulf %38, %39 : vector<16x32xf32>
    %41 = arith.addf %36, %37 : vector<16x32xf32>
    %42 = arith.addf %41, %40 : vector<16x32xf32>
    %cst_26 = arith.constant 0.333333343 : f32
    %43 = vector.broadcast %cst_26 : f32 to vector<16x32xf32>
    %44 = arith.mulf %42, %43 : vector<16x32xf32>
    %c320 = arith.constant 320 : index
    %c0_27 = arith.constant 0 : index
    %45 = vector.load %arg2[%c320, %c0_27] : memref<848x32xf32, #tpu.memory_space<vmem>>, vector<1x32xf32>
    %46 = vector.broadcast %45 : vector<1x32xf32> to vector<16x32xf32>
    %47 = arith.addf %44, %46 : vector<16x32xf32>
    %cst_28 = arith.constant 0.000000e+00 : f32
    %48 = vector.broadcast %cst_28 : f32 to vector<16x32xf32>
    %49 = arith.maximumf %47, %48 : vector<16x32xf32>
    %c1_i32_29 = arith.constant 1 : i32
    %50 = tpu.dynamic_rotate %49 by %c1_i32_29 dim 0 : vector<16x32xf32>, i32 -> vector<16x32xf32>
    %51 = arith.mulf %50, %39 : vector<16x32xf32>
    %c328 = arith.constant 328 : index
    %c0_30 = arith.constant 0 : index
    %52 = vector.load %arg2[%c328, %c0_30] : memref<848x32xf32, #tpu.memory_space<vmem>>, vector<32x32xf32>
    %cst_31 = arith.constant dense<0.000000e+00> : vector<16x32xf32>
    %53 = tpu.matmul %51, %52, %cst_31 {dimension_numbers = #tpu.dot_dimension_numbers<[1], [0], [0], [1], [0, 0, 1, 1], [], []>} : vector<16x32xf32>, vector<32x32xf32>, vector<16x32xf32> -> vector<16x32xf32>
    %c360 = arith.constant 360 : index
    %c0_32 = arith.constant 0 : index
    %54 = vector.load %arg2[%c360, %c0_32] : memref<848x32xf32, #tpu.memory_space<vmem>>, vector<32x32xf32>
    %cst_33 = arith.constant dense<0.000000e+00> : vector<16x32xf32>
    %55 = tpu.matmul %49, %54, %cst_33 {dimension_numbers = #tpu.dot_dimension_numbers<[1], [0], [0], [1], [0, 0, 1, 1], [], []>} : vector<16x32xf32>, vector<32x32xf32>, vector<16x32xf32> -> vector<16x32xf32>
    %56 = arith.addf %53, %55 : vector<16x32xf32>
    %c15_i32 = arith.constant 15 : i32
    %57 = tpu.dynamic_rotate %49 by %c15_i32 dim 0 : vector<16x32xf32>, i32 -> vector<16x32xf32>
    %c32 = arith.constant 32 : index
    %c0_34 = arith.constant 0 : index
    %58 = vector.load %arg2[%c32, %c0_34] : memref<848x32xf32, #tpu.memory_space<vmem>>, vector<16x32xf32>
    %59 = arith.mulf %57, %58 : vector<16x32xf32>
    %c392 = arith.constant 392 : index
    %c0_35 = arith.constant 0 : index
    %60 = vector.load %arg2[%c392, %c0_35] : memref<848x32xf32, #tpu.memory_space<vmem>>, vector<32x32xf32>
    %cst_36 = arith.constant dense<0.000000e+00> : vector<16x32xf32>
    %61 = tpu.matmul %59, %60, %cst_36 {dimension_numbers = #tpu.dot_dimension_numbers<[1], [0], [0], [1], [0, 0, 1, 1], [], []>} : vector<16x32xf32>, vector<32x32xf32>, vector<16x32xf32> -> vector<16x32xf32>
    %62 = arith.addf %56, %61 : vector<16x32xf32>
    %c424 = arith.constant 424 : index
    %c0_37 = arith.constant 0 : index
    %63 = vector.load %arg2[%c424, %c0_37] : memref<848x32xf32, #tpu.memory_space<vmem>>, vector<1x32xf32>
    %64 = vector.broadcast %63 : vector<1x32xf32> to vector<16x32xf32>
    %65 = arith.addf %62, %64 : vector<16x32xf32>
    %c0_38 = arith.constant 0 : index
    %c0_39 = arith.constant 0 : index
    %66 = vector.load %arg4[%c0_38, %c0_39] : memref<32x32xf32, #tpu.memory_space<vmem>>, vector<16x32xf32>
    tpu.vector_store %arg4[%c0_38, %c0_39], %65 {strides = array<i32>} : memref<32x32xf32, #tpu.memory_space<vmem>>, vector<16x32xf32>,
    %c0_40 = arith.constant 0 : index
    %c0_41 = arith.constant 0 : index
    %67 = tpu.strided_load %arg4[%c0_40, %c0_41] {strides = array<i32: 2, 1>} : memref<32x32xf32, #tpu.memory_space<vmem>>, vector<8x32xf32>
    %c1_42 = arith.constant 1 : index
    %c0_43 = arith.constant 0 : index
    %68 = tpu.strided_load %arg4[%c1_42, %c0_43] {strides = array<i32: 2, 1>} : memref<32x32xf32, #tpu.memory_space<vmem>>, vector<8x32xf32>
    %c1_i32_44 = arith.constant 1 : i32
    %69 = tpu.dynamic_rotate %68 by %c1_i32_44 dim 0 : vector<8x32xf32>, i32 -> vector<8x32xf32>
    %c0_45 = arith.constant 0 : index
    %c0_46 = arith.constant 0 : index
    %70 = vector.load %arg2[%c0_45, %c0_46] : memref<848x32xf32, #tpu.memory_space<vmem>>, vector<8x32xf32>
    %71 = arith.mulf %69, %70 : vector<8x32xf32>
    %72 = arith.addf %67, %68 : vector<8x32xf32>
    %73 = arith.addf %72, %71 : vector<8x32xf32>
    %cst_47 = arith.constant 0.333333343 : f32
    %74 = vector.broadcast %cst_47 : f32 to vector<8x32xf32>
    %75 = arith.mulf %73, %74 : vector<8x32xf32>
    %c432 = arith.constant 432 : index
    %c0_48 = arith.constant 0 : index
    %76 = vector.load %arg2[%c432, %c0_48] : memref<848x32xf32, #tpu.memory_space<vmem>>, vector<1x32xf32>
    %77 = vector.broadcast %76 : vector<1x32xf32> to vector<8x32xf32>
    %78 = arith.addf %75, %77 : vector<8x32xf32>
    %cst_49 = arith.constant 0.000000e+00 : f32
    %79 = vector.broadcast %cst_49 : f32 to vector<8x32xf32>
    %80 = arith.maximumf %78, %79 : vector<8x32xf32>
    %c472 = arith.constant 472 : index
    %c0_50 = arith.constant 0 : index
    %81 = vector.load %arg2[%c472, %c0_50] : memref<848x32xf32, #tpu.memory_space<vmem>>, vector<32x32xf32>
    %cst_51 = arith.constant dense<0.000000e+00> : vector<8x32xf32>
    %82 = tpu.matmul %80, %81, %cst_51 {dimension_numbers = #tpu.dot_dimension_numbers<[1], [0], [0], [1], [0, 0, 1, 1], [], []>} : vector<8x32xf32>, vector<32x32xf32>, vector<8x32xf32> -> vector<8x32xf32>
    %c504 = arith.constant 504 : index
    %c0_52 = arith.constant 0 : index
    %83 = vector.load %arg2[%c504, %c0_52] : memref<848x32xf32, #tpu.memory_space<vmem>>, vector<32x32xf32>
    %cst_53 = arith.constant dense<0.000000e+00> : vector<8x32xf32>
    %84 = tpu.matmul %80, %83, %cst_53 {dimension_numbers = #tpu.dot_dimension_numbers<[1], [0], [0], [1], [0, 0, 1, 1], [], []>} : vector<8x32xf32>, vector<32x32xf32>, vector<8x32xf32> -> vector<8x32xf32>
    %c7_i32 = arith.constant 7 : i32
    %85 = tpu.dynamic_rotate %80 by %c7_i32 dim 0 : vector<8x32xf32>, i32 -> vector<8x32xf32>
    %c8 = arith.constant 8 : index
    %c0_54 = arith.constant 0 : index
    %86 = vector.load %arg2[%c8, %c0_54] : memref<848x32xf32, #tpu.memory_space<vmem>>, vector<8x32xf32>
    %87 = arith.mulf %85, %86 : vector<8x32xf32>
    %c440 = arith.constant 440 : index
    %c0_55 = arith.constant 0 : index
    %88 = vector.load %arg2[%c440, %c0_55] : memref<848x32xf32, #tpu.memory_space<vmem>>, vector<32x32xf32>
    %cst_56 = arith.constant dense<0.000000e+00> : vector<8x32xf32>
    %89 = tpu.matmul %87, %88, %cst_56 {dimension_numbers = #tpu.dot_dimension_numbers<[1], [0], [0], [1], [0, 0, 1, 1], [], []>} : vector<8x32xf32>, vector<32x32xf32>, vector<8x32xf32> -> vector<8x32xf32>
    %90 = arith.addf %84, %89 : vector<8x32xf32>
    %c752 = arith.constant 752 : index
    %c0_57 = arith.constant 0 : index
    %91 = vector.load %arg2[%c752, %c0_57] : memref<848x32xf32, #tpu.memory_space<vmem>>, vector<16x32xf32>
    %c768 = arith.constant 768 : index
    %c0_58 = arith.constant 0 : index
    %92 = vector.load %arg2[%c768, %c0_58] : memref<848x32xf32, #tpu.memory_space<vmem>>, vector<16x32xf32>
    %93 = vector.extract_strided_slice %91 {offsets = [0, 0], sizes = [16, 8], strides = [1, 1]} : vector<16x32xf32> to vector<16x8xf32>
    %cst_59 = arith.constant dense<0.000000e+00> : vector<16x32xf32>
    %94 = tpu.matmul %93, %82, %cst_59 {dimension_numbers = #tpu.dot_dimension_numbers<[1], [0], [0], [1], [0, 0, 1, 1], [], []>} : vector<16x8xf32>, vector<8x32xf32>, vector<16x32xf32> -> vector<16x32xf32>
    %95 = vector.extract_strided_slice %92 {offsets = [0, 0], sizes = [16, 8], strides = [1, 1]} : vector<16x32xf32> to vector<16x8xf32>
    %cst_60 = arith.constant dense<0.000000e+00> : vector<16x32xf32>
    %96 = tpu.matmul %95, %90, %cst_60 {dimension_numbers = #tpu.dot_dimension_numbers<[1], [0], [0], [1], [0, 0, 1, 1], [], []>} : vector<16x8xf32>, vector<8x32xf32>, vector<16x32xf32> -> vector<16x32xf32>
    %97 = arith.addf %94, %96 : vector<16x32xf32>
    %c536 = arith.constant 536 : index
    %c0_61 = arith.constant 0 : index
    %98 = vector.load %arg2[%c536, %c0_61] : memref<848x32xf32, #tpu.memory_space<vmem>>, vector<1x32xf32>
    %99 = vector.broadcast %98 : vector<1x32xf32> to vector<16x32xf32>
    %100 = arith.addf %97, %99 : vector<16x32xf32>
    %cst_62 = arith.constant 0.000000e+00 : f32
    %101 = vector.broadcast %cst_62 : f32 to vector<16x32xf32>
    %102 = arith.maximumf %100, %101 : vector<16x32xf32>
    %c576 = arith.constant 576 : index
    %c0_63 = arith.constant 0 : index
    %103 = vector.load %arg2[%c576, %c0_63] : memref<848x32xf32, #tpu.memory_space<vmem>>, vector<32x32xf32>
    %cst_64 = arith.constant dense<0.000000e+00> : vector<16x32xf32>
    %104 = tpu.matmul %102, %103, %cst_64 {dimension_numbers = #tpu.dot_dimension_numbers<[1], [0], [0], [1], [0, 0, 1, 1], [], []>} : vector<16x32xf32>, vector<32x32xf32>, vector<16x32xf32> -> vector<16x32xf32>
    %c608 = arith.constant 608 : index
    %c0_65 = arith.constant 0 : index
    %105 = vector.load %arg2[%c608, %c0_65] : memref<848x32xf32, #tpu.memory_space<vmem>>, vector<32x32xf32>
    %cst_66 = arith.constant dense<0.000000e+00> : vector<16x32xf32>
    %106 = tpu.matmul %102, %105, %cst_66 {dimension_numbers = #tpu.dot_dimension_numbers<[1], [0], [0], [1], [0, 0, 1, 1], [], []>} : vector<16x32xf32>, vector<32x32xf32>, vector<16x32xf32> -> vector<16x32xf32>
    %c15_i32_67 = arith.constant 15 : i32
    %107 = tpu.dynamic_rotate %102 by %c15_i32_67 dim 0 : vector<16x32xf32>, i32 -> vector<16x32xf32>
    %108 = arith.mulf %107, %58 : vector<16x32xf32>
    %c544 = arith.constant 544 : index
    %c0_68 = arith.constant 0 : index
    %109 = vector.load %arg2[%c544, %c0_68] : memref<848x32xf32, #tpu.memory_space<vmem>>, vector<32x32xf32>
    %cst_69 = arith.constant dense<0.000000e+00> : vector<16x32xf32>
    %110 = tpu.matmul %108, %109, %cst_69 {dimension_numbers = #tpu.dot_dimension_numbers<[1], [0], [0], [1], [0, 0, 1, 1], [], []>} : vector<16x32xf32>, vector<32x32xf32>, vector<16x32xf32> -> vector<16x32xf32>
    %111 = arith.addf %106, %110 : vector<16x32xf32>
    %c784 = arith.constant 784 : index
    %c0_70 = arith.constant 0 : index
    %112 = vector.load %arg2[%c784, %c0_70] : memref<848x32xf32, #tpu.memory_space<vmem>>, vector<32x32xf32>
    %c816 = arith.constant 816 : index
    %c0_71 = arith.constant 0 : index
    %113 = vector.load %arg2[%c816, %c0_71] : memref<848x32xf32, #tpu.memory_space<vmem>>, vector<32x32xf32>
    %114 = vector.extract_strided_slice %112 {offsets = [0, 0], sizes = [32, 16], strides = [1, 1]} : vector<32x32xf32> to vector<32x16xf32>
    %cst_72 = arith.constant dense<0.000000e+00> : vector<32x32xf32>
    %115 = tpu.matmul %114, %104, %cst_72 {dimension_numbers = #tpu.dot_dimension_numbers<[1], [0], [0], [1], [0, 0, 1, 1], [], []>} : vector<32x16xf32>, vector<16x32xf32>, vector<32x32xf32> -> vector<32x32xf32>
    %116 = vector.extract_strided_slice %113 {offsets = [0, 0], sizes = [32, 16], strides = [1, 1]} : vector<32x32xf32> to vector<32x16xf32>
    %cst_73 = arith.constant dense<0.000000e+00> : vector<32x32xf32>
    %117 = tpu.matmul %116, %111, %cst_73 {dimension_numbers = #tpu.dot_dimension_numbers<[1], [0], [0], [1], [0, 0, 1, 1], [], []>} : vector<32x16xf32>, vector<16x32xf32>, vector<32x32xf32> -> vector<32x32xf32>
    %118 = arith.addf %115, %117 : vector<32x32xf32>
    %c640 = arith.constant 640 : index
    %c0_74 = arith.constant 0 : index
    %119 = vector.load %arg2[%c640, %c0_74] : memref<848x32xf32, #tpu.memory_space<vmem>>, vector<1x32xf32>
    %120 = vector.broadcast %119 : vector<1x32xf32> to vector<32x32xf32>
    %121 = arith.addf %118, %120 : vector<32x32xf32>
    %cst_75 = arith.constant 0.000000e+00 : f32
    %122 = vector.broadcast %cst_75 : f32 to vector<32x32xf32>
    %123 = arith.maximumf %121, %122 : vector<32x32xf32>
    %c1_i32_76 = arith.constant 1 : i32
    %124 = tpu.dynamic_rotate %123 by %c1_i32_76 dim 0 : vector<32x32xf32>, i32 -> vector<32x32xf32>
    %125 = arith.mulf %124, %2 : vector<32x32xf32>
    %c648 = arith.constant 648 : index
    %c0_77 = arith.constant 0 : index
    %126 = vector.load %arg2[%c648, %c0_77] : memref<848x32xf32, #tpu.memory_space<vmem>>, vector<32x32xf32>
    %cst_78 = arith.constant dense<0.000000e+00> : vector<32x32xf32>
    %127 = tpu.matmul %125, %126, %cst_78 {dimension_numbers = #tpu.dot_dimension_numbers<[1], [0], [0], [1], [0, 0, 1, 1], [], []>} : vector<32x32xf32>, vector<32x32xf32>, vector<32x32xf32> -> vector<32x32xf32>
    %c680 = arith.constant 680 : index
    %c0_79 = arith.constant 0 : index
    %128 = vector.load %arg2[%c680, %c0_79] : memref<848x32xf32, #tpu.memory_space<vmem>>, vector<32x32xf32>
    %cst_80 = arith.constant dense<0.000000e+00> : vector<32x32xf32>
    %129 = tpu.matmul %123, %128, %cst_80 {dimension_numbers = #tpu.dot_dimension_numbers<[1], [0], [0], [1], [0, 0, 1, 1], [], []>} : vector<32x32xf32>, vector<32x32xf32>, vector<32x32xf32> -> vector<32x32xf32>
    %130 = arith.addf %127, %129 : vector<32x32xf32>
    %c31_i32_81 = arith.constant 31 : i32
    %131 = tpu.dynamic_rotate %123 by %c31_i32_81 dim 0 : vector<32x32xf32>, i32 -> vector<32x32xf32>
    %132 = arith.mulf %131, %10 : vector<32x32xf32>
    %c712 = arith.constant 712 : index
    %c0_82 = arith.constant 0 : index
    %133 = vector.load %arg2[%c712, %c0_82] : memref<848x32xf32, #tpu.memory_space<vmem>>, vector<32x32xf32>
    %cst_83 = arith.constant dense<0.000000e+00> : vector<32x32xf32>
    %134 = tpu.matmul %132, %133, %cst_83 {dimension_numbers = #tpu.dot_dimension_numbers<[1], [0], [0], [1], [0, 0, 1, 1], [], []>} : vector<32x32xf32>, vector<32x32xf32>, vector<32x32xf32> -> vector<32x32xf32>
    %135 = arith.addf %130, %134 : vector<32x32xf32>
    %c744 = arith.constant 744 : index
    %c0_84 = arith.constant 0 : index
    %136 = vector.load %arg2[%c744, %c0_84] : memref<848x32xf32, #tpu.memory_space<vmem>>, vector<1x32xf32>
    %137 = vector.broadcast %136 : vector<1x32xf32> to vector<32x32xf32>
    %138 = arith.addf %135, %137 : vector<32x32xf32>
    %cst_85 = arith.constant 0.000000e+00 : f32
    %139 = vector.broadcast %cst_85 : f32 to vector<32x32xf32>
    %140 = arith.maximumf %138, %139 : vector<32x32xf32>
    %c0_86 = arith.constant 0 : index
    %c0_87 = arith.constant 0 : index
    %141 = vector.load %arg3[%c0_86, %c0_87] : memref<32x32xf32, #tpu.memory_space<vmem>>, vector<32x32xf32>
    tpu.vector_store %arg3[%c0_86, %c0_87], %140 {strides = array<i32>} : memref<32x32xf32, #tpu.memory_space<vmem>>, vector<32x32xf32>,
    return
  }
  func.func @transform_0(%arg0: i32) -> (i32, i32) {
    %c0_i32 = arith.constant 0 : i32
    %c0_i32_0 = arith.constant 0 : i32
    %c0_i32_1 = arith.constant 0 : i32
    return %c0_i32, %c0_i32_0 : i32, i32
  }
  func.func @transform_1(%arg0: i32) -> (i32, i32) {
    %c0_i32 = arith.constant 0 : i32
    %c0_i32_0 = arith.constant 0 : i32
    %c0_i32_1 = arith.constant 0 : i32
    return %c0_i32, %c0_i32_0 : i32, i32
  }
  func.func @transform_2(%arg0: i32) -> (i32, i32) {
    %c0_i32 = arith.constant 0 : i32
    %c0_i32_0 = arith.constant 0 : i32
    %c0_i32_1 = arith.constant 0 : i32
    return %c0_i32, %c0_i32_0 : i32, i32
  }
}

</mosaic_0001>

<llo_original>
// kernel: forward.1
$region0: #{forward.1}
  #allocation0 [shape = 'u32[]', space=smem, size = 0x4, offset = 0x4, fixed_abs, tag = 'smem constant byte address 0x4 - core index']
  #allocation1 [shape = 'u32[72,128]{1,0:T(1,128)}', space=vmem, size = 0x9000, scoped, tag = 'internal scratch']
  #allocation2 [shape = 'f32[32,32]{1,0:T(8,128)}', space=vmem, size = 0x4000, scoped, tag = 'scratch operand']
  #allocation3 [shape = 'f32[16,32]{1,0:T(8,128)}', space=vmem, size = 0x2000, scoped, tag = 'scratch operand']
  #allocation4 [shape = 'f32[32,32]{1,0:T(8,128)}', space=vmem, size = 0x4000, scoped, tag = 'scratch operand']
  %s0 = inlined_call_operand.vmem [shape: f32[32,32], index: 0, kind: input, shape index: {}]
  %s1 = inlined_call_operand.vmem [shape: f32[848,32], index: 1, kind: input, shape index: {}]
  %s2 = inlined_call_operand.vmem [shape: f32[32,32], index: 2, kind: output, shape index: {}]
  %s3 = sld [smem:[#allocation0]]
  $region18: #{forward.1} parent=0
    _
  %s5 = ssub.s32 1, %s3
  %s6 = scalar_select 0, %s5, %s3
  // Predicated region
  $region2: #{forward.1} parent=0 // pred_check
    _
  $region3: #{forward.1} parent=0 // pred_check_branch
    %8 = sbr.rel (0) target = $region5
  $region4: #{forward.1} parent=0 // pred_region
    _
  $region5: #{forward.1} parent=0 // pred_fallthru
    _
  // Predicated region
  $region6: #{forward.1} parent=0 // pred_check
    _
  $region7: #{forward.1} parent=0 // pred_check_branch
    %10 = sbr.rel (0) target = $region9
  $region8: #{forward.1} parent=0 // pred_region
    _
  $region9: #{forward.1} parent=0 // pred_fallthru
    _
  %v11 = vld [vmem:[%s0] sm:$0xff]
  %v12 = vld [vmem:[%s0 + $0x8] sm:$0xff]
  %v13 = vld [vmem:[%s0 + $0x10] sm:$0xff]
  %v14 = vld [vmem:[%s0 + $0x18] sm:$0xff]
  %v15 = vrot.slane %v11, 7
  %v16 = vrot.slane %v12, 7
  %v17 = vrot.slane %v13, 7
  %v18 = vrot.slane %v14, 7
  %v19 = vlaneseq
  %v20 = vshrl.u32 %v19, 7
  %vm21 = vcmp.lt.s32.totalorder %v20, 1
  %v22 = vsel %vm21, %v17, %v18
  %v23 = vsel %vm21, %v16, %v17
  %v24 = vsel %vm21, %v15, %v16
  %v25 = vsel %vm21, %v18, %v15
  %v26 = vld [vmem:[%s1 + $0x30] sm:$0xff]
  %v27 = vld [vmem:[%s1 + $0x38] sm:$0xff]
  %v28 = vld [vmem:[%s1 + $0x40] sm:$0xff]
  %v29 = vld [vmem:[%s1 + $0x48] sm:$0xff]
  %v30 = vmul.f32 %v25, %v26
  %v31 = vmul.f32 %v24, %v27
  %v32 = vmul.f32 %v23, %v28
  %v33 = vmul.f32 %v22, %v29
  %v34 = vld [vmem:[%s1 + $0x70] sm:$0xff]
  %v35 = vld [vmem:[%s1 + $0x78] sm:$0xff]
  %v36 = vld [vmem:[%s1 + $0x80] sm:$0xff]
  %v37 = vld [vmem:[%s1 + $0x88] sm:$0xff]
  %v38 = vld [vmem:[%s1 + $0x90] sm:$0xff]
  %v39 = vld [vmem:[%s1 + $0x98] sm:$0xff]
  %v40 = vld [vmem:[%s1 + $0xa0] sm:$0xff]
  %v41 = vld [vmem:[%s1 + $0xa8] sm:$0xff]
  %vm42 = vcmask 261120
  %v44 = vsel %vm42, %v11, 0
  %v47 = vsel %vm42, %v12, 0
  %v50 = vsel %vm42, %v13, 0
  %v53 = vsel %vm42, %v14, 0
  %55 = vmatpush.msra.mxu0 0.0
  %56 = vmatpush.msra.mxu0 0.0
  %57 = vmatpush.msra.mxu0 0.0
  %58 = vmatpush.msra.mxu0 0.0
  %59 = vmatpush.msra.mxu0 0.0
  %60 = vmatpush.msra.mxu0 0.0
  %61 = vmatpush.msra.mxu0 0.0
  %62 = vmatpush.msra.mxu0 0.0
  %63 = vmatpush.msra.mxu0 0.0
  %64 = vmatpush.msra.mxu0 0.0
  %65 = vmatpush.msra.mxu0 0.0
  %66 = vmatpush.msra.mxu0 0.0
  %67 = vmatpush.msra.mxu0 %v41
  %68 = vmatpush.msra.mxu0 %v40
  %69 = vmatpush.msra.mxu0 %v39
  %70 = vmatpush.msra.mxu0 %v38
  %71 = vmatmul.f32.gmra.mxu0 %v44
  %v72 = vpop.f32.mrf.mxu0
  %v73 = vadd.f32 0.0, %v72
  %74 = vmatmul.f32.gmra.mxu0 %v47
  %v75 = vpop.f32.mrf.mxu0
  %v76 = vadd.f32 0.0, %v75
  %77 = vmatmul.f32.gmra.mxu0 %v50
  %v78 = vpop.f32.mrf.mxu0
  %v79 = vadd.f32 0.0, %v78
  %80 = vmatmul.f32.gmra.mxu0 %v53
  %v81 = vpop.f32.mrf.mxu0
  %v82 = vadd.f32 0.0, %v81
  %83 = vdwg.mxu0
  %v85 = vsel %vm42, %v30, 0
  %v88 = vsel %vm42, %v31, 0
  %v91 = vsel %vm42, %v32, 0
  %v94 = vsel %vm42, %v33, 0
  %96 = vmatpush.msra.mxu0 0.0
  %97 = vmatpush.msra.mxu0 0.0
  %98 = vmatpush.msra.mxu0 0.0
  %99 = vmatpush.msra.mxu0 0.0
  %100 = vmatpush.msra.mxu0 0.0
  %101 = vmatpush.msra.mxu0 0.0
  %102 = vmatpush.msra.mxu0 0.0
  %103 = vmatpush.msra.mxu0 0.0
  %104 = vmatpush.msra.mxu0 0.0
  %105 = vmatpush.msra.mxu0 0.0
  %106 = vmatpush.msra.mxu0 0.0
  %107 = vmatpush.msra.mxu0 0.0
  %108 = vmatpush.msra.mxu0 %v37
  %109 = vmatpush.msra.mxu0 %v36
  %110 = vmatpush.msra.mxu0 %v35
  %111 = vmatpush.msra.mxu0 %v34
  %112 = vmatmul.f32.gmra.mxu0 %v85
  %v113 = vpop.f32.mrf.mxu0
  %v114 = vadd.f32 %v73, %v113
  %115 = vmatmul.f32.gmra.mxu0 %v88
  %v116 = vpop.f32.mrf.mxu0
  %v117 = vadd.f32 %v76, %v116
  %118 = vmatmul.f32.gmra.mxu0 %v91
  %v119 = vpop.f32.mrf.mxu0
  %v120 = vadd.f32 %v79, %v119
  %121 = vmatmul.f32.gmra.mxu0 %v94
  %v122 = vpop.f32.mrf.mxu0
  %v123 = vadd.f32 %v82, %v122
  %124 = vdwg.mxu0
  %v125 = vrot.slane %v11, 1
  %v126 = vrot.slane %v12, 1
  %v127 = vrot.slane %v13, 1
  %v128 = vrot.slane %v14, 1
  %vm129 = vcmp.lt.s32.totalorder %v20, 7
  %v130 = vsel %vm129, %v127, %v128
  %v131 = vsel %vm129, %v126, %v127
  %v132 = vsel %vm129, %v125, %v126
  %v133 = vsel %vm129, %v128, %v125
  %v134 = vld [vmem:[%s1 + $0x50] sm:$0xff]
  %v135 = vld [vmem:[%s1 + $0x58] sm:$0xff]
  %v136 = vld [vmem:[%s1 + $0x60] sm:$0xff]
  %v137 = vld [vmem:[%s1 + $0x68] sm:$0xff]
  %v138 = vmul.f32 %v132, %v134
  %v139 = vmul.f32 %v131, %v135
  %v140 = vmul.f32 %v130, %v136
  %v141 = vmul.f32 %v133, %v137
  %v142 = vld [vmem:[%s1 + $0xb0] sm:$0xff]
  %v143 = vld [vmem:[%s1 + $0xb8] sm:$0xff]
  %v144 = vld [vmem:[%s1 + $0xc0] sm:$0xff]
  %v145 = vld [vmem:[%s1 + $0xc8] sm:$0xff]
  %v147 = vsel %vm42, %v138, 0
  %v150 = vsel %vm42, %v139, 0
  %v153 = vsel %vm42, %v140, 0
  %v156 = vsel %vm42, %v141, 0
  %158 = vmatpush.msra.mxu0 0.0
  %159 = vmatpush.msra.mxu0 0.0
  %160 = vmatpush.msra.mxu0 0.0
  %161 = vmatpush.msra.mxu0 0.0
  %162 = vmatpush.msra.mxu0 0.0
  %163 = vmatpush.msra.mxu0 0.0
  %164 = vmatpush.msra.mxu0 0.0
  %165 = vmatpush.msra.mxu0 0.0
  %166 = vmatpush.msra.mxu0 0.0
  %167 = vmatpush.msra.mxu0 0.0
  %168 = vmatpush.msra.mxu0 0.0
  %169 = vmatpush.msra.mxu0 0.0
  %170 = vmatpush.msra.mxu0 %v145
  %171 = vmatpush.msra.mxu0 %v144
  %172 = vmatpush.msra.mxu0 %v143
  %173 = vmatpush.msra.mxu0 %v142
  %174 = vmatmul.f32.gmra.mxu0 %v147
  %v175 = vpop.f32.mrf.mxu0
  %v176 = vadd.f32 0.0, %v175
  %177 = vmatmul.f32.gmra.mxu0 %v150
  %v178 = vpop.f32.mrf.mxu0
  %v179 = vadd.f32 0.0, %v178
  %180 = vmatmul.f32.gmra.mxu0 %v153
  %v181 = vpop.f32.mrf.mxu0
  %v182 = vadd.f32 0.0, %v181
  %183 = vmatmul.f32.gmra.mxu0 %v156
  %v184 = vpop.f32.mrf.mxu0
  %v185 = vadd.f32 0.0, %v184
  %186 = vdwg.mxu0
  %v187 = vadd.f32 %v114, %v176
  %v188 = vadd.f32 %v117, %v179
  %v189 = vadd.f32 %v120, %v182
  %v190 = vadd.f32 %v123, %v185
  %v191 = vld [vmem:[%s1 + $0xd0] sm:$0x1]
  %v192 = vperm.slane %v191, 0
  %v193 = vadd.f32 %v187, %v192
  %v194 = vadd.f32 %v188, %v192
  %v195 = vadd.f32 %v189, %v192
  %v196 = vadd.f32 %v190, %v192
  %v197 = vmax.f32 %v193, 0.0
  %v198 = vmax.f32 %v194, 0.0
  %v199 = vmax.f32 %v195, 0.0
  %v200 = vmax.f32 %v196, 0.0
  %v201 = vrot.slane %v197, 7
  %v202 = vrot.slane %v198, 7
  %v203 = vrot.slane %v199, 7
  %v204 = vrot.slane %v200, 7
  %v205 = vsel %vm21, %v203, %v204
  %v206 = vsel %vm21, %v202, %v203
  %v207 = vsel %vm21, %v201, %v202
  %v208 = vsel %vm21, %v204, %v201
  %v209 = vmul.f32 %v208, %v26
  %v210 = vmul.f32 %v207, %v27
  %v211 = vmul.f32 %v206, %v28
  %v212 = vmul.f32 %v205, %v29
  %v213 = vld [vmem:[%s1 + $0xd8] sm:$0xff]
  %v214 = vld [vmem:[%s1 + $0xe0] sm:$0xff]
  %v215 = vld [vmem:[%s1 + $0xe8] sm:$0xff]
  %v216 = vld [vmem:[%s1 + $0xf0] sm:$0xff]
  %v217 = vld [vmem:[%s1 + $0xf8] sm:$0xff]
  %v218 = vld [vmem:[%s1 + $0x100] sm:$0xff]
  %v219 = vld [vmem:[%s1 + $0x108] sm:$0xff]
  %v220 = vld [vmem:[%s1 + $0x110] sm:$0xff]
  %v222 = vsel %vm42, %v197, 0
  %v225 = vsel %vm42, %v198, 0
  %v228 = vsel %vm42, %v199, 0
  %v231 = vsel %vm42, %v200, 0
  %233 = vmatpush.msra.mxu0 0.0
  %234 = vmatpush.msra.mxu0 0.0
  %235 = vmatpush.msra.mxu0 0.0
  %236 = vmatpush.msra.mxu0 0.0
  %237 = vmatpush.msra.mxu0 0.0
  %238 = vmatpush.msra.mxu0 0.0
  %239 = vmatpush.msra.mxu0 0.0
  %240 = vmatpush.msra.mxu0 0.0
  %241 = vmatpush.msra.mxu0 0.0
  %242 = vmatpush.msra.mxu0 0.0
  %243 = vmatpush.msra.mxu0 0.0
  %244 = vmatpush.msra.mxu0 0.0
  %245 = vmatpush.msra.mxu0 %v220
  %246 = vmatpush.msra.mxu0 %v219
  %247 = vmatpush.msra.mxu0 %v218
  %248 = vmatpush.msra.mxu0 %v217
  %249 = vmatmul.f32.gmra.mxu0 %v222
  %v250 = vpop.f32.mrf.mxu0
  %v251 = vadd.f32 0.0, %v250
  %252 = vmatmul.f32.gmra.mxu0 %v225
  %v253 = vpop.f32.mrf.mxu0
  %v254 = vadd.f32 0.0, %v253
  %255 = vmatmul.f32.gmra.mxu0 %v228
  %v256 = vpop.f32.mrf.mxu0
  %v257 = vadd.f32 0.0, %v256
  %258 = vmatmul.f32.gmra.mxu0 %v231
  %v259 = vpop.f32.mrf.mxu0
  %v260 = vadd.f32 0.0, %v259
  %261 = vdwg.mxu0
  %v263 = vsel %vm42, %v209, 0
  %v266 = vsel %vm42, %v210, 0
  %v269 = vsel %vm42, %v211, 0
  %v272 = vsel %vm42, %v212, 0
  %274 = vmatpush.msra.mxu0 0.0
  %275 = vmatpush.msra.mxu0 0.0
  %276 = vmatpush.msra.mxu0 0.0
  %277 = vmatpush.msra.mxu0 0.0
  %278 = vmatpush.msra.mxu0 0.0
  %279 = vmatpush.msra.mxu0 0.0
  %280 = vmatpush.msra.mxu0 0.0
  %281 = vmatpush.msra.mxu0 0.0
  %282 = vmatpush.msra.mxu0 0.0
  %283 = vmatpush.msra.mxu0 0.0
  %284 = vmatpush.msra.mxu0 0.0
  %285 = vmatpush.msra.mxu0 0.0
  %286 = vmatpush.msra.mxu0 %v216
  %287 = vmatpush.msra.mxu0 %v215
  %288 = vmatpush.msra.mxu0 %v214
  %289 = vmatpush.msra.mxu0 %v213
  %290 = vmatmul.f32.gmra.mxu0 %v263
  %v291 = vpop.f32.mrf.mxu0
  %v292 = vadd.f32 %v251, %v291
  %293 = vmatmul.f32.gmra.mxu0 %v266
  %v294 = vpop.f32.mrf.mxu0
  %v295 = vadd.f32 %v254, %v294
  %296 = vmatmul.f32.gmra.mxu0 %v269
  %v297 = vpop.f32.mrf.mxu0
  %v298 = vadd.f32 %v257, %v297
  %299 = vmatmul.f32.gmra.mxu0 %v272
  %v300 = vpop.f32.mrf.mxu0
  %v301 = vadd.f32 %v260, %v300
  %302 = vdwg.mxu0
  %v303 = vrot.slane %v197, 1
  %v304 = vrot.slane %v198, 1
  %v305 = vrot.slane %v199, 1
  %v306 = vrot.slane %v200, 1
  %v307 = vsel %vm129, %v305, %v306
  %v308 = vsel %vm129, %v304, %v305
  %v309 = vsel %vm129, %v303, %v304
  %v310 = vsel %vm129, %v306, %v303
  %v311 = vmul.f32 %v309, %v134
  %v312 = vmul.f32 %v308, %v135
  %v313 = vmul.f32 %v307, %v136
  %v314 = vmul.f32 %v310, %v137
  %v315 = vld [vmem:[%s1 + $0x118] sm:$0xff]
  %v316 = vld [vmem:[%s1 + $0x120] sm:$0xff]
  %v317 = vld [vmem:[%s1 + $0x128] sm:$0xff]
  %v318 = vld [vmem:[%s1 + $0x130] sm:$0xff]
  %v320 = vsel %vm42, %v311, 0
  %v323 = vsel %vm42, %v312, 0
  %v326 = vsel %vm42, %v313, 0
  %v329 = vsel %vm42, %v314, 0
  %331 = vmatpush.msra.mxu0 0.0
  %332 = vmatpush.msra.mxu0 0.0
  %333 = vmatpush.msra.mxu0 0.0
  %334 = vmatpush.msra.mxu0 0.0
  %335 = vmatpush.msra.mxu0 0.0
  %336 = vmatpush.msra.mxu0 0.0
  %337 = vmatpush.msra.mxu0 0.0
  %338 = vmatpush.msra.mxu0 0.0
  %339 = vmatpush.msra.mxu0 0.0
  %340 = vmatpush.msra.mxu0 0.0
  %341 = vmatpush.msra.mxu0 0.0
  %342 = vmatpush.msra.mxu0 0.0
  %343 = vmatpush.msra.mxu0 %v318
  %344 = vmatpush.msra.mxu0 %v317
  %345 = vmatpush.msra.mxu0 %v316
  %346 = vmatpush.msra.mxu0 %v315
  %347 = vmatmul.f32.gmra.mxu0 %v320
  %v348 = vpop.f32.mrf.mxu0
  %v349 = vadd.f32 0.0, %v348
  %350 = vmatmul.f32.gmra.mxu0 %v323
  %v351 = vpop.f32.mrf.mxu0
  %v352 = vadd.f32 0.0, %v351
  %353 = vmatmul.f32.gmra.mxu0 %v326
  %v354 = vpop.f32.mrf.mxu0
  %v355 = vadd.f32 0.0, %v354
  %356 = vmatmul.f32.gmra.mxu0 %v329
  %v357 = vpop.f32.mrf.mxu0
  %v358 = vadd.f32 0.0, %v357
  %359 = vdwg.mxu0
  %v360 = vadd.f32 %v292, %v349
  %v361 = vadd.f32 %v295, %v352
  %v362 = vadd.f32 %v298, %v355
  %v363 = vadd.f32 %v301, %v358
  %v364 = vld [vmem:[%s1 + $0x138] sm:$0x1]
  %v365 = vperm.slane %v364, 0
  %v366 = vadd.f32 %v360, %v365
  %v367 = vadd.f32 %v361, %v365
  %v368 = vadd.f32 %v362, %v365
  %v369 = vadd.f32 %v363, %v365
  %370 = vst.msk [vmem:[#allocation2] sm:$0xff] %vm42, %v366
  %371 = vst.msk [vmem:[#allocation2 + $0x8] sm:$0xff] %vm42, %v367
  %372 = vst.msk [vmem:[#allocation2 + $0x10] sm:$0xff] %vm42, %v368
  %373 = vst.msk [vmem:[#allocation2 + $0x18] sm:$0xff] %vm42, %v369
  %v374 = vld [vmem:[#allocation2] ss:$2 sm:$0xff]
  %s375 = scalar_lea.vmem [#allocation2], 16
  %v376 = vld [vmem:[%s375] ss:$2 sm:$0xff]
  %s377 = scalar_lea.vmem [#allocation2], 1
  %v378 = vld [vmem:[%s377] ss:$2 sm:$0xff]
  %s379 = scalar_lea.vmem [#allocation2], 17
  %v380 = vld [vmem:[%s379] ss:$2 sm:$0xff]
  %v381 = vrot.slane %v378, 7
  %v382 = vrot.slane %v380, 7
  %v383 = vsel %vm21, %v381, %v382
  %v384 = vsel %vm21, %v382, %v381
  %v385 = vld [vmem:[%s1 + $0x10] sm:$0xff]
  %v386 = vld [vmem:[%s1 + $0x18] sm:$0xff]
  %v387 = vmul.f32 %v384, %v385
  %v388 = vmul.f32 %v383, %v386
  %v389 = vadd.f32 %v374, %v378
  %v390 = vadd.f32 %v376, %v380
  %v391 = vadd.f32 %v389, %v387
  %v392 = vadd.f32 %v390, %v388
  %v393 = vmul.f32 %v391, 0.33333334
  %v394 = vmul.f32 %v392, 0.33333334
  %v395 = vld [vmem:[%s1 + $0x140] sm:$0x1]
  %v396 = vperm.slane %v395, 0
  %v397 = vadd.f32 %v393, %v396
  %v398 = vadd.f32 %v394, %v396
  %v399 = vmax.f32 %v397, 0.0
  %v400 = vmax.f32 %v398, 0.0
  %v401 = vrot.slane %v399, 7
  %v402 = vrot.slane %v400, 7
  %v403 = vsel %vm21, %v401, %v402
  %v404 = vsel %vm21, %v402, %v401
  %v405 = vmul.f32 %v404, %v385
  %v406 = vmul.f32 %v403, %v386
  %v407 = vld [vmem:[%s1 + $0x148] sm:$0xff]
  %v408 = vld [vmem:[%s1 + $0x150] sm:$0xff]
  %v409 = vld [vmem:[%s1 + $0x158] sm:$0xff]
  %v410 = vld [vmem:[%s1 + $0x160] sm:$0xff]
  %v411 = vld [vmem:[%s1 + $0x168] sm:$0xff]
  %v412 = vld [vmem:[%s1 + $0x170] sm:$0xff]
  %v413 = vld [vmem:[%s1 + $0x178] sm:$0xff]
  %v414 = vld [vmem:[%s1 + $0x180] sm:$0xff]
  %v416 = vsel %vm42, %v399, 0
  %v419 = vsel %vm42, %v400, 0
  %421 = vmatpush.msra.mxu0 0.0
  %422 = vmatpush.msra.mxu0 0.0
  %423 = vmatpush.msra.mxu0 0.0
  %424 = vmatpush.msra.mxu0 0.0
  %425 = vmatpush.msra.mxu0 0.0
  %426 = vmatpush.msra.mxu0 0.0
  %427 = vmatpush.msra.mxu0 0.0
  %428 = vmatpush.msra.mxu0 0.0
  %429 = vmatpush.msra.mxu0 0.0
  %430 = vmatpush.msra.mxu0 0.0
  %431 = vmatpush.msra.mxu0 0.0
  %432 = vmatpush.msra.mxu0 0.0
  %433 = vmatpush.msra.mxu0 %v414
  %434 = vmatpush.msra.mxu0 %v413
  %435 = vmatpush.msra.mxu0 %v412
  %436 = vmatpush.msra.mxu0 %v411
  %437 = vmatmul.f32.gmra.mxu0 %v416
  %v438 = vpop.f32.mrf.mxu0
  %v439 = vadd.f32 0.0, %v438
  %440 = vmatmul.f32.gmra.mxu0 %v419
  %v441 = vpop.f32.mrf.mxu0
  %v442 = vadd.f32 0.0, %v441
  %443 = vdwg.mxu0
  %v445 = vsel %vm42, %v405, 0
  %v448 = vsel %vm42, %v406, 0
  %450 = vmatpush.msra.mxu0 0.0
  %451 = vmatpush.msra.mxu0 0.0
  %452 = vmatpush.msra.mxu0 0.0
  %453 = vmatpush.msra.mxu0 0.0
  %454 = vmatpush.msra.mxu0 0.0
  %455 = vmatpush.msra.mxu0 0.0
  %456 = vmatpush.msra.mxu0 0.0
  %457 = vmatpush.msra.mxu0 0.0
  %458 = vmatpush.msra.mxu0 0.0
  %459 = vmatpush.msra.mxu0 0.0
  %460 = vmatpush.msra.mxu0 0.0
  %461 = vmatpush.msra.mxu0 0.0
  %462 = vmatpush.msra.mxu0 %v410
  %463 = vmatpush.msra.mxu0 %v409
  %464 = vmatpush.msra.mxu0 %v408
  %465 = vmatpush.msra.mxu0 %v407
  %466 = vmatmul.f32.gmra.mxu0 %v445
  %v467 = vpop.f32.mrf.mxu0
  %v468 = vadd.f32 %v439, %v467
  %469 = vmatmul.f32.gmra.mxu0 %v448
  %v470 = vpop.f32.mrf.mxu0
  %v471 = vadd.f32 %v442, %v470
  %472 = vdwg.mxu0
  %v473 = vrot.slane %v399, 1
  %v474 = vrot.slane %v400, 1
  %v475 = vsel %vm129, %v473, %v474
  %v476 = vsel %vm129, %v474, %v473
  %v477 = vld [vmem:[%s1 + $0x20] sm:$0xff]
  %v478 = vld [vmem:[%s1 + $0x28] sm:$0xff]
  %v479 = vmul.f32 %v475, %v477
  %v480 = vmul.f32 %v476, %v478
  %v481 = vld [vmem:[%s1 + $0x188] sm:$0xff]
  %v482 = vld [vmem:[%s1 + $0x190] sm:$0xff]
  %v483 = vld [vmem:[%s1 + $0x198] sm:$0xff]
  %v484 = vld [vmem:[%s1 + $0x1a0] sm:$0xff]
  %v486 = vsel %vm42, %v479, 0
  %v489 = vsel %vm42, %v480, 0
  %491 = vmatpush.msra.mxu0 0.0
  %492 = vmatpush.msra.mxu0 0.0
  %493 = vmatpush.msra.mxu0 0.0
  %494 = vmatpush.msra.mxu0 0.0
  %495 = vmatpush.msra.mxu0 0.0
  %496 = vmatpush.msra.mxu0 0.0
  %497 = vmatpush.msra.mxu0 0.0
  %498 = vmatpush.msra.mxu0 0.0
  %499 = vmatpush.msra.mxu0 0.0
  %500 = vmatpush.msra.mxu0 0.0
  %501 = vmatpush.msra.mxu0 0.0
  %502 = vmatpush.msra.mxu0 0.0
  %503 = vmatpush.msra.mxu0 %v484
  %504 = vmatpush.msra.mxu0 %v483
  %505 = vmatpush.msra.mxu0 %v482
  %506 = vmatpush.msra.mxu0 %v481
  %507 = vmatmul.f32.gmra.mxu0 %v486
  %v508 = vpop.f32.mrf.mxu0
  %v509 = vadd.f32 0.0, %v508
  %510 = vmatmul.f32.gmra.mxu0 %v489
  %v511 = vpop.f32.mrf.mxu0
  %v512 = vadd.f32 0.0, %v511
  %513 = vdwg.mxu0
  %v514 = vadd.f32 %v468, %v509
  %v515 = vadd.f32 %v471, %v512
  %v516 = vld [vmem:[%s1 + $0x1a8] sm:$0x1]
  %v517 = vperm.slane %v516, 0
  %v518 = vadd.f32 %v514, %v517
  %v519 = vadd.f32 %v515, %v517
  %520 = vst.msk [vmem:[#allocation2] sm:$0xff] %vm42, %v518
  %521 = vst.msk [vmem:[#allocation2 + $0x8] sm:$0xff] %vm42, %v519
  %v522 = vld [vmem:[#allocation2] ss:$2 sm:$0xff]
  %v523 = vld [vmem:[%s377] ss:$2 sm:$0xff]
  %v524 = vrot.slane %v523, 7
  %v525 = vld [vmem:[%s1] sm:$0xff]
  %v526 = vmul.f32 %v524, %v525
  %v527 = vadd.f32 %v522, %v523
  %v528 = vadd.f32 %v527, %v526
  %v529 = vmul.f32 %v528, 0.33333334
  %v530 = vld [vmem:[%s1 + $0x1b0] sm:$0x1]
  %v531 = vperm.slane %v530, 0
  %v532 = vadd.f32 %v529, %v531
  %v533 = vmax.f32 %v532, 0.0
  %v534 = vld [vmem:[%s1 + $0x1d8] sm:$0xff]
  %v535 = vld [vmem:[%s1 + $0x1e0] sm:$0xff]
  %v536 = vld [vmem:[%s1 + $0x1e8] sm:$0xff]
  %v537 = vld [vmem:[%s1 + $0x1f0] sm:$0xff]
  %v539 = vsel %vm42, %v533, 0
  %541 = vmatpush.msra.mxu0 0.0
  %542 = vmatpush.msra.mxu0 0.0
  %543 = vmatpush.msra.mxu0 0.0
  %544 = vmatpush.msra.mxu0 0.0
  %545 = vmatpush.msra.mxu0 0.0
  %546 = vmatpush.msra.mxu0 0.0
  %547 = vmatpush.msra.mxu0 0.0
  %548 = vmatpush.msra.mxu0 0.0
  %549 = vmatpush.msra.mxu0 0.0
  %550 = vmatpush.msra.mxu0 0.0
  %551 = vmatpush.msra.mxu0 0.0
  %552 = vmatpush.msra.mxu0 0.0
  %553 = vmatpush.msra.mxu0 %v537
  %554 = vmatpush.msra.mxu0 %v536
  %555 = vmatpush.msra.mxu0 %v535
  %556 = vmatpush.msra.mxu0 %v534
  %557 = vmatmul.f32.gmra.mxu0 %v539
  %v558 = vpop.f32.mrf.mxu0
  %v559 = vadd.f32 0.0, %v558
  %560 = vdwg.mxu0
  %v561 = vld [vmem:[%s1 + $0x1f8] sm:$0xff]
  %v562 = vld [vmem:[%s1 + $0x200] sm:$0xff]
  %v563 = vld [vmem:[%s1 + $0x208] sm:$0xff]
  %v564 = vld [vmem:[%s1 + $0x210] sm:$0xff]
  %v565 = vrot.slane %v533, 1
  %v566 = vld [vmem:[%s1 + $0x8] sm:$0xff]
  %v567 = vmul.f32 %v565, %v566
  %v568 = vld [vmem:[%s1 + $0x1b8] sm:$0xff]
  %v569 = vld [vmem:[%s1 + $0x1c0] sm:$0xff]
  %v570 = vld [vmem:[%s1 + $0x1c8] sm:$0xff]
  %v571 = vld [vmem:[%s1 + $0x1d0] sm:$0xff]
  %v573 = vsel %vm42, %v567, 0
  %575 = vmatpush.msra.mxu0 0.0
  %576 = vmatpush.msra.mxu0 0.0
  %577 = vmatpush.msra.mxu0 0.0
  %578 = vmatpush.msra.mxu0 0.0
  %579 = vmatpush.msra.mxu0 0.0
  %580 = vmatpush.msra.mxu0 0.0
  %581 = vmatpush.msra.mxu0 0.0
  %582 = vmatpush.msra.mxu0 0.0
  %583 = vmatpush.msra.mxu0 0.0
  %584 = vmatpush.msra.mxu0 0.0
  %585 = vmatpush.msra.mxu0 0.0
  %586 = vmatpush.msra.mxu0 0.0
  %587 = vmatpush.msra.mxu0 %v571
  %588 = vmatpush.msra.mxu0 %v570
  %589 = vmatpush.msra.mxu0 %v569
  %590 = vmatpush.msra.mxu0 %v568
  %591 = vmatmul.f32.gmra.mxu0 %v573
  %v592 = vpop.f32.mrf.mxu0
  %v593 = vadd.f32 0.0, %v592
  %594 = vdwg.mxu0
  %595 = vmatpush.msra.mxu0 0.0
  %596 = vmatpush.msra.mxu0 0.0
  %597 = vmatpush.msra.mxu0 0.0
  %598 = vmatpush.msra.mxu0 0.0
  %599 = vmatpush.msra.mxu0 0.0
  %600 = vmatpush.msra.mxu0 0.0
  %601 = vmatpush.msra.mxu0 0.0
  %602 = vmatpush.msra.mxu0 0.0
  %603 = vmatpush.msra.mxu0 0.0
  %604 = vmatpush.msra.mxu0 0.0
  %605 = vmatpush.msra.mxu0 0.0
  %606 = vmatpush.msra.mxu0 0.0
  %607 = vmatpush.msra.mxu0 %v564
  %608 = vmatpush.msra.mxu0 %v563
  %609 = vmatpush.msra.mxu0 %v562
  %610 = vmatpush.msra.mxu0 %v561
  %611 = vmatmul.f32.gmra.mxu0 %v539
  %v612 = vpop.f32.mrf.mxu0
  %v613 = vadd.f32 %v593, %v612
  %614 = vdwg.mxu0
  %615 = vst [vmem:[#allocation3] ss:$2 sm:$0xff] %v559
  %s616 = scalar_lea.vmem [#allocation3], 1
  %617 = vst [vmem:[%s616] ss:$2 sm:$0xff] %v613
  %v618 = vld [vmem:[#allocation3] sm:$0xff]
  %v619 = vld [vmem:[#allocation3 + $0x8] sm:$0xff]
  %v620 = vld [vmem:[%s1 + $0x218] sm:$0x1]
  %v621 = vperm.slane %v620, 0
  %v622 = vadd.f32 %v618, %v621
  %v623 = vadd.f32 %v619, %v621
  %v624 = vmax.f32 %v622, 0.0
  %v625 = vmax.f32 %v623, 0.0
  %v626 = vld [vmem:[%s1 + $0x240] sm:$0xff]
  %v627 = vld [vmem:[%s1 + $0x248] sm:$0xff]
  %v628 = vld [vmem:[%s1 + $0x250] sm:$0xff]
  %v629 = vld [vmem:[%s1 + $0x258] sm:$0xff]
  %v631 = vsel %vm42, %v624, 0
  %v634 = vsel %vm42, %v625, 0
  %636 = vmatpush.msra.mxu0 0.0
  %637 = vmatpush.msra.mxu0 0.0
  %638 = vmatpush.msra.mxu0 0.0
  %639 = vmatpush.msra.mxu0 0.0
  %640 = vmatpush.msra.mxu0 0.0
  %641 = vmatpush.msra.mxu0 0.0
  %642 = vmatpush.msra.mxu0 0.0
  %643 = vmatpush.msra.mxu0 0.0
  %644 = vmatpush.msra.mxu0 0.0
  %645 = vmatpush.msra.mxu0 0.0
  %646 = vmatpush.msra.mxu0 0.0
  %647 = vmatpush.msra.mxu0 0.0
  %648 = vmatpush.msra.mxu0 %v629
  %649 = vmatpush.msra.mxu0 %v628
  %650 = vmatpush.msra.mxu0 %v627
  %651 = vmatpush.msra.mxu0 %v626
  %652 = vmatmul.f32.gmra.mxu0 %v631
  %v653 = vpop.f32.mrf.mxu0
  %v654 = vadd.f32 0.0, %v653
  %655 = vmatmul.f32.gmra.mxu0 %v634
  %v656 = vpop.f32.mrf.mxu0
  %v657 = vadd.f32 0.0, %v656
  %658 = vdwg.mxu0
  %v659 = vld [vmem:[%s1 + $0x260] sm:$0xff]
  %v660 = vld [vmem:[%s1 + $0x268] sm:$0xff]
  %v661 = vld [vmem:[%s1 + $0x270] sm:$0xff]
  %v662 = vld [vmem:[%s1 + $0x278] sm:$0xff]
  %v663 = vrot.slane %v624, 1
  %v664 = vrot.slane %v625, 1
  %v665 = vsel %vm129, %v663, %v664
  %v666 = vsel %vm129, %v664, %v663
  %v667 = vmul.f32 %v665, %v477
  %v668 = vmul.f32 %v666, %v478
  %v669 = vld [vmem:[%s1 + $0x220] sm:$0xff]
  %v670 = vld [vmem:[%s1 + $0x228] sm:$0xff]
  %v671 = vld [vmem:[%s1 + $0x230] sm:$0xff]
  %v672 = vld [vmem:[%s1 + $0x238] sm:$0xff]
  %v674 = vsel %vm42, %v667, 0
  %v677 = vsel %vm42, %v668, 0
  %679 = vmatpush.msra.mxu0 0.0
  %680 = vmatpush.msra.mxu0 0.0
  %681 = vmatpush.msra.mxu0 0.0
  %682 = vmatpush.msra.mxu0 0.0
  %683 = vmatpush.msra.mxu0 0.0
  %684 = vmatpush.msra.mxu0 0.0
  %685 = vmatpush.msra.mxu0 0.0
  %686 = vmatpush.msra.mxu0 0.0
  %687 = vmatpush.msra.mxu0 0.0
  %688 = vmatpush.msra.mxu0 0.0
  %689 = vmatpush.msra.mxu0 0.0
  %690 = vmatpush.msra.mxu0 0.0
  %691 = vmatpush.msra.mxu0 %v672
  %692 = vmatpush.msra.mxu0 %v671
  %693 = vmatpush.msra.mxu0 %v670
  %694 = vmatpush.msra.mxu0 %v669
  %695 = vmatmul.f32.gmra.mxu0 %v674
  %v696 = vpop.f32.mrf.mxu0
  %v697 = vadd.f32 0.0, %v696
  %698 = vmatmul.f32.gmra.mxu0 %v677
  %v699 = vpop.f32.mrf.mxu0
  %v700 = vadd.f32 0.0, %v699
  %701 = vdwg.mxu0
  %702 = vmatpush.msra.mxu0 0.0
  %703 = vmatpush.msra.mxu0 0.0
  %704 = vmatpush.msra.mxu0 0.0
  %705 = vmatpush.msra.mxu0 0.0
  %706 = vmatpush.msra.mxu0 0.0
  %707 = vmatpush.msra.mxu0 0.0
  %708 = vmatpush.msra.mxu0 0.0
  %709 = vmatpush.msra.mxu0 0.0
  %710 = vmatpush.msra.mxu0 0.0
  %711 = vmatpush.msra.mxu0 0.0
  %712 = vmatpush.msra.mxu0 0.0
  %713 = vmatpush.msra.mxu0 0.0
  %714 = vmatpush.msra.mxu0 %v662
  %715 = vmatpush.msra.mxu0 %v661
  %716 = vmatpush.msra.mxu0 %v660
  %717 = vmatpush.msra.mxu0 %v659
  %718 = vmatmul.f32.gmra.mxu0 %v631
  %v719 = vpop.f32.mrf.mxu0
  %v720 = vadd.f32 %v697, %v719
  %721 = vmatmul.f32.gmra.mxu0 %v634
  %v722 = vpop.f32.mrf.mxu0
  %v723 = vadd.f32 %v700, %v722
  %724 = vdwg.mxu0
  %725 = vst [vmem:[#allocation4] ss:$2 sm:$0xff] %v654
  %s726 = scalar_lea.vmem [#allocation4], 16
  %727 = vst [vmem:[%s726] ss:$2 sm:$0xff] %v657
  %s728 = scalar_lea.vmem [#allocation4], 1
  %729 = vst [vmem:[%s728] ss:$2 sm:$0xff] %v720
  %s730 = scalar_lea.vmem [#allocation4], 17
  %731 = vst [vmem:[%s730] ss:$2 sm:$0xff] %v723
  %v732 = vld [vmem:[#allocation4] sm:$0xff]
  %v733 = vld [vmem:[#allocation4 + $0x8] sm:$0xff]
  %v734 = vld [vmem:[#allocation4 + $0x10] sm:$0xff]
  %v735 = vld [vmem:[#allocation4 + $0x18] sm:$0xff]
  %v736 = vld [vmem:[%s1 + $0x280] sm:$0x1]
  %v737 = vperm.slane %v736, 0
  %v738 = vadd.f32 %v732, %v737
  %v739 = vadd.f32 %v733, %v737
  %v740 = vadd.f32 %v734, %v737
  %v741 = vadd.f32 %v735, %v737
  %v742 = vmax.f32 %v738, 0.0
  %v743 = vmax.f32 %v739, 0.0
  %v744 = vmax.f32 %v740, 0.0
  %v745 = vmax.f32 %v741, 0.0
  %v746 = vrot.slane %v742, 7
  %v747 = vrot.slane %v743, 7
  %v748 = vrot.slane %v744, 7
  %v749 = vrot.slane %v745, 7
  %v750 = vsel %vm21, %v748, %v749
  %v751 = vsel %vm21, %v747, %v748
  %v752 = vsel %vm21, %v746, %v747
  %v753 = vsel %vm21, %v749, %v746
  %v754 = vmul.f32 %v753, %v26
  %v755 = vmul.f32 %v752, %v27
  %v756 = vmul.f32 %v751, %v28
  %v757 = vmul.f32 %v750, %v29
  %v758 = vld [vmem:[%s1 + $0x288] sm:$0xff]
  %v759 = vld [vmem:[%s1 + $0x290] sm:$0xff]
  %v760 = vld [vmem:[%s1 + $0x298] sm:$0xff]
  %v761 = vld [vmem:[%s1 + $0x2a0] sm:$0xff]
  %v762 = vld [vmem:[%s1 + $0x2a8] sm:$0xff]
  %v763 = vld [vmem:[%s1 + $0x2b0] sm:$0xff]
  %v764 = vld [vmem:[%s1 + $0x2b8] sm:$0xff]
  %v765 = vld [vmem:[%s1 + $0x2c0] sm:$0xff]
  %v767 = vsel %vm42, %v742, 0
  %v770 = vsel %vm42, %v743, 0
  %v773 = vsel %vm42, %v744, 0
  %v776 = vsel %vm42, %v745, 0
  %778 = vmatpush.msra.mxu0 0.0
  %779 = vmatpush.msra.mxu0 0.0
  %780 = vmatpush.msra.mxu0 0.0
  %781 = vmatpush.msra.mxu0 0.0
  %782 = vmatpush.msra.mxu0 0.0
  %783 = vmatpush.msra.mxu0 0.0
  %784 = vmatpush.msra.mxu0 0.0
  %785 = vmatpush.msra.mxu0 0.0
  %786 = vmatpush.msra.mxu0 0.0
  %787 = vmatpush.msra.mxu0 0.0
  %788 = vmatpush.msra.mxu0 0.0
  %789 = vmatpush.msra.mxu0 0.0
  %790 = vmatpush.msra.mxu0 %v765
  %791 = vmatpush.msra.mxu0 %v764
  %792 = vmatpush.msra.mxu0 %v763
  %793 = vmatpush.msra.mxu0 %v762
  %794 = vmatmul.f32.gmra.mxu0 %v767
  %v795 = vpop.f32.mrf.mxu0
  %v796 = vadd.f32 0.0, %v795
  %797 = vmatmul.f32.gmra.mxu0 %v770
  %v798 = vpop.f32.mrf.mxu0
  %v799 = vadd.f32 0.0, %v798
  %800 = vmatmul.f32.gmra.mxu0 %v773
  %v801 = vpop.f32.mrf.mxu0
  %v802 = vadd.f32 0.0, %v801
  %803 = vmatmul.f32.gmra.mxu0 %v776
  %v804 = vpop.f32.mrf.mxu0
  %v805 = vadd.f32 0.0, %v804
  %806 = vdwg.mxu0
  %v808 = vsel %vm42, %v754, 0
  %v811 = vsel %vm42, %v755, 0
  %v814 = vsel %vm42, %v756, 0
  %v817 = vsel %vm42, %v757, 0
  %819 = vmatpush.msra.mxu0 0.0
  %820 = vmatpush.msra.mxu0 0.0
  %821 = vmatpush.msra.mxu0 0.0
  %822 = vmatpush.msra.mxu0 0.0
  %823 = vmatpush.msra.mxu0 0.0
  %824 = vmatpush.msra.mxu0 0.0
  %825 = vmatpush.msra.mxu0 0.0
  %826 = vmatpush.msra.mxu0 0.0
  %827 = vmatpush.msra.mxu0 0.0
  %828 = vmatpush.msra.mxu0 0.0
  %829 = vmatpush.msra.mxu0 0.0
  %830 = vmatpush.msra.mxu0 0.0
  %831 = vmatpush.msra.mxu0 %v761
  %832 = vmatpush.msra.mxu0 %v760
  %833 = vmatpush.msra.mxu0 %v759
  %834 = vmatpush.msra.mxu0 %v758
  %835 = vmatmul.f32.gmra.mxu0 %v808
  %v836 = vpop.f32.mrf.mxu0
  %v837 = vadd.f32 %v796, %v836
  %838 = vmatmul.f32.gmra.mxu0 %v811
  %v839 = vpop.f32.mrf.mxu0
  %v840 = vadd.f32 %v799, %v839
  %841 = vmatmul.f32.gmra.mxu0 %v814
  %v842 = vpop.f32.mrf.mxu0
  %v843 = vadd.f32 %v802, %v842
  %844 = vmatmul.f32.gmra.mxu0 %v817
  %v845 = vpop.f32.mrf.mxu0
  %v846 = vadd.f32 %v805, %v845
  %847 = vdwg.mxu0
  %v848 = vrot.slane %v742, 1
  %v849 = vrot.slane %v743, 1
  %v850 = vrot.slane %v744, 1
  %v851 = vrot.slane %v745, 1
  %v852 = vsel %vm129, %v850, %v851
  %v853 = vsel %vm129, %v849, %v850
  %v854 = vsel %vm129, %v848, %v849
  %v855 = vsel %vm129, %v851, %v848
  %v856 = vmul.f32 %v854, %v134
  %v857 = vmul.f32 %v853, %v135
  %v858 = vmul.f32 %v852, %v136
  %v859 = vmul.f32 %v855, %v137
  %v860 = vld [vmem:[%s1 + $0x2c8] sm:$0xff]
  %v861 = vld [vmem:[%s1 + $0x2d0] sm:$0xff]
  %v862 = vld [vmem:[%s1 + $0x2d8] sm:$0xff]
  %v863 = vld [vmem:[%s1 + $0x2e0] sm:$0xff]
  %v865 = vsel %vm42, %v856, 0
  %v868 = vsel %vm42, %v857, 0
  %v871 = vsel %vm42, %v858, 0
  %v874 = vsel %vm42, %v859, 0
  %876 = vmatpush.msra.mxu0 0.0
  %877 = vmatpush.msra.mxu0 0.0
  %878 = vmatpush.msra.mxu0 0.0
  %879 = vmatpush.msra.mxu0 0.0
  %880 = vmatpush.msra.mxu0 0.0
  %881 = vmatpush.msra.mxu0 0.0
  %882 = vmatpush.msra.mxu0 0.0
  %883 = vmatpush.msra.mxu0 0.0
  %884 = vmatpush.msra.mxu0 0.0
  %885 = vmatpush.msra.mxu0 0.0
  %886 = vmatpush.msra.mxu0 0.0
  %887 = vmatpush.msra.mxu0 0.0
  %888 = vmatpush.msra.mxu0 %v863
  %889 = vmatpush.msra.mxu0 %v862
  %890 = vmatpush.msra.mxu0 %v861
  %891 = vmatpush.msra.mxu0 %v860
  %892 = vmatmul.f32.gmra.mxu0 %v865
  %v893 = vpop.f32.mrf.mxu0
  %v894 = vadd.f32 0.0, %v893
  %895 = vmatmul.f32.gmra.mxu0 %v868
  %v896 = vpop.f32.mrf.mxu0
  %v897 = vadd.f32 0.0, %v896
  %898 = vmatmul.f32.gmra.mxu0 %v871
  %v899 = vpop.f32.mrf.mxu0
  %v900 = vadd.f32 0.0, %v899
  %901 = vmatmul.f32.gmra.mxu0 %v874
  %v902 = vpop.f32.mrf.mxu0
  %v903 = vadd.f32 0.0, %v902
  %904 = vdwg.mxu0
  %v905 = vadd.f32 %v837, %v894
  %v906 = vadd.f32 %v840, %v897
  %v907 = vadd.f32 %v843, %v900
  %v908 = vadd.f32 %v846, %v903
  %v909 = vld [vmem:[%s1 + $0x2e8] sm:$0x1]
  %v910 = vperm.slane %v909, 0
  %v911 = vadd.f32 %v905, %v910
  %v912 = vadd.f32 %v906, %v910
  %v913 = vadd.f32 %v907, %v910
  %v914 = vadd.f32 %v908, %v910
  %v915 = vmax.f32 %v911, 0.0
  %v916 = vmax.f32 %v912, 0.0
  %v917 = vmax.f32 %v913, 0.0
  %v918 = vmax.f32 %v914, 0.0
  %919 = vst.msk [vmem:[%s2] sm:$0xff] %vm42, %v915
  %920 = vst.msk [vmem:[%s2 + $0x8] sm:$0xff] %vm42, %v916
  %921 = vst.msk [vmem:[%s2 + $0x10] sm:$0xff] %vm42, %v917
  %922 = vst.msk [vmem:[%s2 + $0x18] sm:$0xff] %vm42, %v918
  // Predicated region
  $region10: #{forward.1} parent=0 // pred_check
    _
  $region11: #{forward.1} parent=0 // pred_check_branch
    %924 = sbr.rel (0) target = $region13
  $region12: #{forward.1} parent=0 // pred_region
    _
  $region13: #{forward.1} parent=0 // pred_fallthru
    _
  // Predicated region
  $region14: #{forward.1} parent=0 // pred_check
    _
  $region15: #{forward.1} parent=0 // pred_check_branch
    %926 = sbr.rel (0) target = $region17
  $region16: #{forward.1} parent=0 // pred_region
    _
  $region17: #{forward.1} parent=0 // pred_fallthru
    _

// kernel: forward.1
$region0: #{forward.1}
  #allocation0 [shape = 'u32[]', space=smem, size = 0x4, offset = 0x4, fixed_abs, tag = 'smem constant byte address 0x4 - core index']
  #allocation1 [shape = 'u32[72,128]{1,0:T(1,128)}', space=vmem, size = 0x9000, scoped, tag = 'internal scratch']
  #allocation2 [shape = 'f32[32,32]{1,0:T(8,128)}', space=vmem, size = 0x4000, scoped, tag = 'scratch operand']
  #allocation3 [shape = 'f32[16,32]{1,0:T(8,128)}', space=vmem, size = 0x2000, scoped, tag = 'scratch operand']
  #allocation4 [shape = 'f32[32,32]{1,0:T(8,128)}', space=vmem, size = 0x4000, scoped, tag = 'scratch operand']
  %s0 = inlined_call_operand.vmem [shape: f32[32,32], index: 0, kind: input, shape index: {}]
  %s1 = inlined_call_operand.vmem [shape: f32[848,32], index: 1, kind: input, shape index: {}]
  %s2 = inlined_call_operand.vmem [shape: f32[32,32], index: 2, kind: output, shape index: {}]
  %s3 = sld [smem:[#allocation0]]
  $region18: #{forward.1} parent=0
    _
  %s5 = ssub.s32 1, %s3
  %s6 = scalar_select 0, %s5, %s3
  // Predicated region
  $region2: #{forward.1} parent=0 // pred_check
    _
  $region3: #{forward.1} parent=0 // pred_check_branch
    %8 = sbr.rel (0) target = $region5
  $region4: #{forward.1} parent=0 // pred_region
    _
  $region5: #{forward.1} parent=0 // pred_fallthru
    _
  // Predicated region
  $region6: #{forward.1} parent=0 // pred_check
    _
  $region7: #{forward.1} parent=0 // pred_check_branch
    %10 = sbr.rel (0) target = $region9
  $region8: #{forward.1} parent=0 // pred_region
    _
  $region9: #{forward.1} parent=0 // pred_fallthru
    _
  %v11 = vld [vmem:[%s0] sm:$0xff]
  %v12 = vld [vmem:[%s0 + $0x8] sm:$0xff]
  %v13 = vld [vmem:[%s0 + $0x10] sm:$0xff]
  %v14 = vld [vmem:[%s0 + $0x18] sm:$0xff]
  %v15 = vrot.slane %v11, 7
  %v16 = vrot.slane %v12, 7
  %v17 = vrot.slane %v13, 7
  %v18 = vrot.slane %v14, 7
  %v19 = vlaneseq
  %v20 = vshrl.u32 %v19, 7
  %vm21 = vcmp.lt.s32.totalorder %v20, 1
  %v22 = vsel %vm21, %v17, %v18
  %v23 = vsel %vm21, %v16, %v17
  %v24 = vsel %vm21, %v15, %v16
  %v25 = vsel %vm21, %v18, %v15
  %v26 = vld [vmem:[%s1 + $0x30] sm:$0xff]
  %v27 = vld [vmem:[%s1 + $0x38] sm:$0xff]
  %v28 = vld [vmem:[%s1 + $0x40] sm:$0xff]
  %v29 = vld [vmem:[%s1 + $0x48] sm:$0xff]
  %v30 = vmul.f32 %v25, %v26
  %v31 = vmul.f32 %v24, %v27
  %v32 = vmul.f32 %v23, %v28
  %v33 = vmul.f32 %v22, %v29
  %v34 = vld [vmem:[%s1 + $0x70] sm:$0xff]
  %v35 = vld [vmem:[%s1 + $0x78] sm:$0xff]
  %v36 = vld [vmem:[%s1 + $0x80] sm:$0xff]
  %v37 = vld [vmem:[%s1 + $0x88] sm:$0xff]
  %v38 = vld [vmem:[%s1 + $0x90] sm:$0xff]
  %v39 = vld [vmem:[%s1 + $0x98] sm:$0xff]
  %v40 = vld [vmem:[%s1 + $0xa0] sm:$0xff]
  %v41 = vld [vmem:[%s1 + $0xa8] sm:$0xff]
  %vm42 = vcmask 261120
  %v44 = vsel %vm42, %v11, 0
  %v47 = vsel %vm42, %v12, 0
  %v50 = vsel %vm42, %v13, 0
  %v53 = vsel %vm42, %v14, 0
  %55 = vmatpush.msra.mxu0 0.0
  %56 = vmatpush.msra.mxu0 0.0
  %57 = vmatpush.msra.mxu0 0.0
  %58 = vmatpush.msra.mxu0 0.0
  %59 = vmatpush.msra.mxu0 0.0
  %60 = vmatpush.msra.mxu0 0.0
  %61 = vmatpush.msra.mxu0 0.0
  %62 = vmatpush.msra.mxu0 0.0
  %63 = vmatpush.msra.mxu0 0.0
  %64 = vmatpush.msra.mxu0 0.0
  %65 = vmatpush.msra.mxu0 0.0
  %66 = vmatpush.msra.mxu0 0.0
  %67 = vmatpush.msra.mxu0 %v41
  %68 = vmatpush.msra.mxu0 %v40
  %69 = vmatpush.msra.mxu0 %v39
  %70 = vmatpush.msra.mxu0 %v38
  %71 = vmatmul.f32.gmra.mxu0 %v44
  %v72 = vpop.f32.mrf.mxu0
  %v73 = vadd.f32 0.0, %v72
  %74 = vmatmul.f32.gmra.mxu0 %v47
  %v75 = vpop.f32.mrf.mxu0
  %v76 = vadd.f32 0.0, %v75
  %77 = vmatmul.f32.gmra.mxu0 %v50
  %v78 = vpop.f32.mrf.mxu0
  %v79 = vadd.f32 0.0, %v78
  %80 = vmatmul.f32.gmra.mxu0 %v53
  %v81 = vpop.f32.mrf.mxu0
  %v82 = vadd.f32 0.0, %v81
  %83 = vdwg.mxu0
  %v85 = vsel %vm42, %v30, 0
  %v88 = vsel %vm42, %v31, 0
  %v91 = vsel %vm42, %v32, 0
  %v94 = vsel %vm42, %v33, 0
  %96 = vmatpush.msra.mxu0 0.0
  %97 = vmatpush.msra.mxu0 0.0
  %98 = vmatpush.msra.mxu0 0.0
  %99 = vmatpush.msra.mxu0 0.0
  %100 = vmatpush.msra.mxu0 0.0
  %101 = vmatpush.msra.mxu0 0.0
  %102 = vmatpush.msra.mxu0 0.0
  %103 = vmatpush.msra.mxu0 0.0
  %104 = vmatpush.msra.mxu0 0.0
  %105 = vmatpush.msra.mxu0 0.0
  %106 = vmatpush.msra.mxu0 0.0
  %107 = vmatpush.msra.mxu0 0.0
  %108 = vmatpush.msra.mxu0 %v37
  %109 = vmatpush.msra.mxu0 %v36
  %110 = vmatpush.msra.mxu0 %v35
  %111 = vmatpush.msra.mxu0 %v34
  %112 = vmatmul.f32.gmra.mxu0 %v85
  %v113 = vpop.f32.mrf.mxu0
  %v114 = vadd.f32 %v73, %v113
  %115 = vmatmul.f32.gmra.mxu0 %v88
  %v116 = vpop.f32.mrf.mxu0
  %v117 = vadd.f32 %v76, %v116
  %118 = vmatmul.f32.gmra.mxu0 %v91
  %v119 = vpop.f32.mrf.mxu0
  %v120 = vadd.f32 %v79, %v119
  %121 = vmatmul.f32.gmra.mxu0 %v94
  %v122 = vpop.f32.mrf.mxu0
  %v123 = vadd.f32 %v82, %v122
  %124 = vdwg.mxu0
  %v125 = vrot.slane %v11, 1
  %v126 = vrot.slane %v12, 1
  %v127 = vrot.slane %v13, 1
  %v128 = vrot.slane %v14, 1
  %vm129 = vcmp.lt.s32.totalorder %v20, 7
  %v130 = vsel %vm129, %v127, %v128
  %v131 = vsel %vm129, %v126, %v127
  %v132 = vsel %vm129, %v125, %v126
  %v133 = vsel %vm129, %v128, %v125
  %v134 = vld [vmem:[%s1 + $0x50] sm:$0xff]
  %v135 = vld [vmem:[%s1 + $0x58] sm:$0xff]
  %v136 = vld [vmem:[%s1 + $0x60] sm:$0xff]
  %v137 = vld [vmem:[%s1 + $0x68] sm:$0xff]
  %v138 = vmul.f32 %v132, %v134
  %v139 = vmul.f32 %v131, %v135
  %v140 = vmul.f32 %v130, %v136
  %v141 = vmul.f32 %v133, %v137
  %v142 = vld [vmem:[%s1 + $0xb0] sm:$0xff]
  %v143 = vld [vmem:[%s1 + $0xb8] sm:$0xff]
  %v144 = vld [vmem:[%s1 + $0xc0] sm:$0xff]
  %v145 = vld [vmem:[%s1 + $0xc8] sm:$0xff]
  %v147 = vsel %vm42, %v138, 0
  %v150 = vsel %vm42, %v139, 0
  %v153 = vsel %vm42, %v140, 0
  %v156 = vsel %vm42, %v141, 0
  %158 = vmatpush.msra.mxu0 0.0
  %159 = vmatpush.msra.mxu0 0.0
  %160 = vmatpush.msra.mxu0 0.0
  %161 = vmatpush.msra.mxu0 0.0
  %162 = vmatpush.msra.mxu0 0.0
  %163 = vmatpush.msra.mxu0 0.0
  %164 = vmatpush.msra.mxu0 0.0
  %165 = vmatpush.msra.mxu0 0.0
  %166 = vmatpush.msra.mxu0 0.0
  %167 = vmatpush.msra.mxu0 0.0
  %168 = vmatpush.msra.mxu0 0.0
  %169 = vmatpush.msra.mxu0 0.0
  %170 = vmatpush.msra.mxu0 %v145
  %171 = vmatpush.msra.mxu0 %v144
  %172 = vmatpush.msra.mxu0 %v143
  %173 = vmatpush.msra.mxu0 %v142
  %174 = vmatmul.f32.gmra.mxu0 %v147
  %v175 = vpop.f32.mrf.mxu0
  %v176 = vadd.f32 0.0, %v175
  %177 = vmatmul.f32.gmra.mxu0 %v150
  %v178 = vpop.f32.mrf.mxu0
  %v179 = vadd.f32 0.0, %v178
  %180 = vmatmul.f32.gmra.mxu0 %v153
  %v181 = vpop.f32.mrf.mxu0
  %v182 = vadd.f32 0.0, %v181
  %183 = vmatmul.f32.gmra.mxu0 %v156
  %v184 = vpop.f32.mrf.mxu0
  %v185 = vadd.f32 0.0, %v184
  %186 = vdwg.mxu0
  %v187 = vadd.f32 %v114, %v176
  %v188 = vadd.f32 %v117, %v179
  %v189 = vadd.f32 %v120, %v182
  %v190 = vadd.f32 %v123, %v185
  %v191 = vld [vmem:[%s1 + $0xd0] sm:$0x1]
  %v192 = vperm.slane %v191, 0
  %v193 = vadd.f32 %v187, %v192
  %v194 = vadd.f32 %v188, %v192
  %v195 = vadd.f32 %v189, %v192
  %v196 = vadd.f32 %v190, %v192
  %v197 = vmax.f32 %v193, 0.0
  %v198 = vmax.f32 %v194, 0.0
  %v199 = vmax.f32 %v195, 0.0
  %v200 = vmax.f32 %v196, 0.0
  %v201 = vrot.slane %v197, 7
  %v202 = vrot.slane %v198, 7
  %v203 = vrot.slane %v199, 7
  %v204 = vrot.slane %v200, 7
  %v205 = vsel %vm21, %v203, %v204
  %v206 = vsel %vm21, %v202, %v203
  %v207 = vsel %vm21, %v201, %v202
  %v208 = vsel %vm21, %v204, %v201
  %v209 = vmul.f32 %v208, %v26
  %v210 = vmul.f32 %v207, %v27
  %v211 = vmul.f32 %v206, %v28
  %v212 = vmul.f32 %v205, %v29
  %v213 = vld [vmem:[%s1 + $0xd8] sm:$0xff]
  %v214 = vld [vmem:[%s1 + $0xe0] sm:$0xff]
  %v215 = vld [vmem:[%s1 + $0xe8] sm:$0xff]
  %v216 = vld [vmem:[%s1 + $0xf0] sm:$0xff]
  %v217 = vld [vmem:[%s1 + $0xf8] sm:$0xff]
  %v218 = vld [vmem:[%s1 + $0x100] sm:$0xff]
  %v219 = vld [vmem:[%s1 + $0x108] sm:$0xff]
  %v220 = vld [vmem:[%s1 + $0x110] sm:$0xff]
  %v222 = vsel %vm42, %v197, 0
  %v225 = vsel %vm42, %v198, 0
  %v228 = vsel %vm42, %v199, 0
  %v231 = vsel %vm42, %v200, 0
  %233 = vmatpush.msra.mxu0 0.0
  %234 = vmatpush.msra.mxu0 0.0
  %235 = vmatpush.msra.mxu0 0.0
  %236 = vmatpush.msra.mxu0 0.0
  %237 = vmatpush.msra.mxu0 0.0
  %238 = vmatpush.msra.mxu0 0.0
  %239 = vmatpush.msra.mxu0 0.0
  %240 = vmatpush.msra.mxu0 0.0
  %241 = vmatpush.msra.mxu0 0.0
  %242 = vmatpush.msra.mxu0 0.0
  %243 = vmatpush.msra.mxu0 0.0
  %244 = vmatpush.msra.mxu0 0.0
  %245 = vmatpush.msra.mxu0 %v220
  %246 = vmatpush.msra.mxu0 %v219
  %247 = vmatpush.msra.mxu0 %v218
  %248 = vmatpush.msra.mxu0 %v217
  %249 = vmatmul.f32.gmra.mxu0 %v222
  %v250 = vpop.f32.mrf.mxu0
  %v251 = vadd.f32 0.0, %v250
  %252 = vmatmul.f32.gmra.mxu0 %v225
  %v253 = vpop.f32.mrf.mxu0
  %v254 = vadd.f32 0.0, %v253
  %255 = vmatmul.f32.gmra.mxu0 %v228
  %v256 = vpop.f32.mrf.mxu0
  %v257 = vadd.f32 0.0, %v256
  %258 = vmatmul.f32.gmra.mxu0 %v231
  %v259 = vpop.f32.mrf.mxu0
  %v260 = vadd.f32 0.0, %v259
  %261 = vdwg.mxu0
  %v263 = vsel %vm42, %v209, 0
  %v266 = vsel %vm42, %v210, 0
  %v269 = vsel %vm42, %v211, 0
  %v272 = vsel %vm42, %v212, 0
  %274 = vmatpush.msra.mxu0 0.0
  %275 = vmatpush.msra.mxu0 0.0
  %276 = vmatpush.msra.mxu0 0.0
  %277 = vmatpush.msra.mxu0 0.0
  %278 = vmatpush.msra.mxu0 0.0
  %279 = vmatpush.msra.mxu0 0.0
  %280 = vmatpush.msra.mxu0 0.0
  %281 = vmatpush.msra.mxu0 0.0
  %282 = vmatpush.msra.mxu0 0.0
  %283 = vmatpush.msra.mxu0 0.0
  %284 = vmatpush.msra.mxu0 0.0
  %285 = vmatpush.msra.mxu0 0.0
  %286 = vmatpush.msra.mxu0 %v216
  %287 = vmatpush.msra.mxu0 %v215
  %288 = vmatpush.msra.mxu0 %v214
  %289 = vmatpush.msra.mxu0 %v213
  %290 = vmatmul.f32.gmra.mxu0 %v263
  %v291 = vpop.f32.mrf.mxu0
  %v292 = vadd.f32 %v251, %v291
  %293 = vmatmul.f32.gmra.mxu0 %v266
  %v294 = vpop.f32.mrf.mxu0
  %v295 = vadd.f32 %v254, %v294
  %296 = vmatmul.f32.gmra.mxu0 %v269
  %v297 = vpop.f32.mrf.mxu0
  %v298 = vadd.f32 %v257, %v297
  %299 = vmatmul.f32.gmra.mxu0 %v272
  %v300 = vpop.f32.mrf.mxu0
  %v301 = vadd.f32 %v260, %v300
  %302 = vdwg.mxu0
  %v303 = vrot.slane %v197, 1
  %v304 = vrot.slane %v198, 1
  %v305 = vrot.slane %v199, 1
  %v306 = vrot.slane %v200, 1
  %v307 = vsel %vm129, %v305, %v306
  %v308 = vsel %vm129, %v304, %v305
  %v309 = vsel %vm129, %v303, %v304
  %v310 = vsel %vm129, %v306, %v303
  %v311 = vmul.f32 %v309, %v134
  %v312 = vmul.f32 %v308, %v135
  %v313 = vmul.f32 %v307, %v136
  %v314 = vmul.f32 %v310, %v137
  %v315 = vld [vmem:[%s1 + $0x118] sm:$0xff]
  %v316 = vld [vmem:[%s1 + $0x120] sm:$0xff]
  %v317 = vld [vmem:[%s1 + $0x128] sm:$0xff]
  %v318 = vld [vmem:[%s1 + $0x130] sm:$0xff]
  %v320 = vsel %vm42, %v311, 0
  %v323 = vsel %vm42, %v312, 0
  %v326 = vsel %vm42, %v313, 0
  %v329 = vsel %vm42, %v314, 0
  %331 = vmatpush.msra.mxu0 0.0
  %332 = vmatpush.msra.mxu0 0.0
  %333 = vmatpush.msra.mxu0 0.0
  %334 = vmatpush.msra.mxu0 0.0
  %335 = vmatpush.msra.mxu0 0.0
  %336 = vmatpush.msra.mxu0 0.0
  %337 = vmatpush.msra.mxu0 0.0
  %338 = vmatpush.msra.mxu0 0.0
  %339 = vmatpush.msra.mxu0 0.0
  %340 = vmatpush.msra.mxu0 0.0
  %341 = vmatpush.msra.mxu0 0.0
  %342 = vmatpush.msra.mxu0 0.0
  %343 = vmatpush.msra.mxu0 %v318
  %344 = vmatpush.msra.mxu0 %v317
  %345 = vmatpush.msra.mxu0 %v316
  %346 = vmatpush.msra.mxu0 %v315
  %347 = vmatmul.f32.gmra.mxu0 %v320
  %v348 = vpop.f32.mrf.mxu0
  %v349 = vadd.f32 0.0, %v348
  %350 = vmatmul.f32.gmra.mxu0 %v323
  %v351 = vpop.f32.mrf.mxu0
  %v352 = vadd.f32 0.0, %v351
  %353 = vmatmul.f32.gmra.mxu0 %v326
  %v354 = vpop.f32.mrf.mxu0
  %v355 = vadd.f32 0.0, %v354
  %356 = vmatmul.f32.gmra.mxu0 %v329
  %v357 = vpop.f32.mrf.mxu0
  %v358 = vadd.f32 0.0, %v357
  %359 = vdwg.mxu0
  %v360 = vadd.f32 %v292, %v349
  %v361 = vadd.f32 %v295, %v352
  %v362 = vadd.f32 %v298, %v355
  %v363 = vadd.f32 %v301, %v358
  %v364 = vld [vmem:[%s1 + $0x138] sm:$0x1]
  %v365 = vperm.slane %v364, 0
  %v366 = vadd.f32 %v360, %v365
  %v367 = vadd.f32 %v361, %v365
  %v368 = vadd.f32 %v362, %v365
  %v369 = vadd.f32 %v363, %v365
  %370 = vst.msk [vmem:[#allocation2] sm:$0xff] %vm42, %v366
  %371 = vst.msk [vmem:[#allocation2 + $0x8] sm:$0xff] %vm42, %v367
  %372 = vst.msk [vmem:[#allocation2 + $0x10] sm:$0xff] %vm42, %v368
  %373 = vst.msk [vmem:[#allocation2 + $0x18] sm:$0xff] %vm42, %v369
  %v374 = vld [vmem:[#allocation2] ss:$2 sm:$0xff]
  %s375 = scalar_lea.vmem [#allocation2], 16
  %v376 = vld [vmem:[%s375] ss:$2 sm:$0xff]
  %s377 = scalar_lea.vmem [#allocation2], 1
  %v378 = vld [vmem:[%s377] ss:$2 sm:$0xff]
  %s379 = scalar_lea.vmem [#allocation2], 17
  %v380 = vld [vmem:[%s379] ss:$2 sm:$0xff]
  %v381 = vrot.slane %v378, 7
  %v382 = vrot.slane %v380, 7
  %v383 = vsel %vm21, %v381, %v382
  %v384 = vsel %vm21, %v382, %v381
  %v385 = vld [vmem:[%s1 + $0x10] sm:$0xff]
  %v386 = vld [vmem:[%s1 + $0x18] sm:$0xff]
  %v387 = vmul.f32 %v384, %v385
  %v388 = vmul.f32 %v383, %v386
  %v389 = vadd.f32 %v374, %v378
  %v390 = vadd.f32 %v376, %v380
  %v391 = vadd.f32 %v389, %v387
  %v392 = vadd.f32 %v390, %v388
  %v393 = vmul.f32 %v391, 0.33333334
  %v394 = vmul.f32 %v392, 0.33333334
  %v395 = vld [vmem:[%s1 + $0x140] sm:$0x1]
  %v396 = vperm.slane %v395, 0
  %v397 = vadd.f32 %v393, %v396
  %v398 = vadd.f32 %v394, %v396
  %v399 = vmax.f32 %v397, 0.0
  %v400 = vmax.f32 %v398, 0.0
  %v401 = vrot.slane %v399, 7
  %v402 = vrot.slane %v400, 7
  %v403 = vsel %vm21, %v401, %v402
  %v404 = vsel %vm21, %v402, %v401
  %v405 = vmul.f32 %v404, %v385
  %v406 = vmul.f32 %v403, %v386
  %v407 = vld [vmem:[%s1 + $0x148] sm:$0xff]
  %v408 = vld [vmem:[%s1 + $0x150] sm:$0xff]
  %v409 = vld [vmem:[%s1 + $0x158] sm:$0xff]
  %v410 = vld [vmem:[%s1 + $0x160] sm:$0xff]
  %v411 = vld [vmem:[%s1 + $0x168] sm:$0xff]
  %v412 = vld [vmem:[%s1 + $0x170] sm:$0xff]
  %v413 = vld [vmem:[%s1 + $0x178] sm:$0xff]
  %v414 = vld [vmem:[%s1 + $0x180] sm:$0xff]
  %v416 = vsel %vm42, %v399, 0
  %v419 = vsel %vm42, %v400, 0
  %421 = vmatpush.msra.mxu0 0.0
  %422 = vmatpush.msra.mxu0 0.0
  %423 = vmatpush.msra.mxu0 0.0
  %424 = vmatpush.msra.mxu0 0.0
  %425 = vmatpush.msra.mxu0 0.0
  %426 = vmatpush.msra.mxu0 0.0
  %427 = vmatpush.msra.mxu0 0.0
  %428 = vmatpush.msra.mxu0 0.0
  %429 = vmatpush.msra.mxu0 0.0
  %430 = vmatpush.msra.mxu0 0.0
  %431 = vmatpush.msra.mxu0 0.0
  %432 = vmatpush.msra.mxu0 0.0
  %433 = vmatpush.msra.mxu0 %v414
  %434 = vmatpush.msra.mxu0 %v413
  %435 = vmatpush.msra.mxu0 %v412
  %436 = vmatpush.msra.mxu0 %v411
  %437 = vmatmul.f32.gmra.mxu0 %v416
  %v438 = vpop.f32.mrf.mxu0
  %v439 = vadd.f32 0.0, %v438
  %440 = vmatmul.f32.gmra.mxu0 %v419
  %v441 = vpop.f32.mrf.mxu0
  %v442 = vadd.f32 0.0, %v441
  %443 = vdwg.mxu0
  %v445 = vsel %vm42, %v405, 0
  %v448 = vsel %vm42, %v406, 0
  %450 = vmatpush.msra.mxu0 0.0
  %451 = vmatpush.msra.mxu0 0.0
  %452 = vmatpush.msra.mxu0 0.0
  %453 = vmatpush.msra.mxu0 0.0
  %454 = vmatpush.msra.mxu0 0.0
  %455 = vmatpush.msra.mxu0 0.0
  %456 = vmatpush.msra.mxu0 0.0
  %457 = vmatpush.msra.mxu0 0.0
  %458 = vmatpush.msra.mxu0 0.0
  %459 = vmatpush.msra.mxu0 0.0
  %460 = vmatpush.msra.mxu0 0.0
  %461 = vmatpush.msra.mxu0 0.0
  %462 = vmatpush.msra.mxu0 %v410
  %463 = vmatpush.msra.mxu0 %v409
  %464 = vmatpush.msra.mxu0 %v408
  %465 = vmatpush.msra.mxu0 %v407
  %466 = vmatmul.f32.gmra.mxu0 %v445
  %v467 = vpop.f32.mrf.mxu0
  %v468 = vadd.f32 %v439, %v467
  %469 = vmatmul.f32.gmra.mxu0 %v448
  %v470 = vpop.f32.mrf.mxu0
  %v471 = vadd.f32 %v442, %v470
  %472 = vdwg.mxu0
  %v473 = vrot.slane %v399, 1
  %v474 = vrot.slane %v400, 1
  %v475 = vsel %vm129, %v473, %v474
  %v476 = vsel %vm129, %v474, %v473
  %v477 = vld [vmem:[%s1 + $0x20] sm:$0xff]
  %v478 = vld [vmem:[%s1 + $0x28] sm:$0xff]
  %v479 = vmul.f32 %v475, %v477
  %v480 = vmul.f32 %v476, %v478
  %v481 = vld [vmem:[%s1 + $0x188] sm:$0xff]
  %v482 = vld [vmem:[%s1 + $0x190] sm:$0xff]
  %v483 = vld [vmem:[%s1 + $0x198] sm:$0xff]
  %v484 = vld [vmem:[%s1 + $0x1a0] sm:$0xff]
  %v486 = vsel %vm42, %v479, 0
  %v489 = vsel %vm42, %v480, 0
  %491 = vmatpush.msra.mxu0 0.0
  %492 = vmatpush.msra.mxu0 0.0
  %493 = vmatpush.msra.mxu0 0.0
  %494 = vmatpush.msra.mxu0 0.0
  %495 = vmatpush.msra.mxu0 0.0
  %496 = vmatpush.msra.mxu0 0.0
  %497 = vmatpush.msra.mxu0 0.0
  %498 = vmatpush.msra.mxu0 0.0
  %499 = vmatpush.msra.mxu0 0.0
  %500 = vmatpush.msra.mxu0 0.0
  %501 = vmatpush.msra.mxu0 0.0
  %502 = vmatpush.msra.mxu0 0.0
  %503 = vmatpush.msra.mxu0 %v484
  %504 = vmatpush.msra.mxu0 %v483
  %505 = vmatpush.msra.mxu0 %v482
  %506 = vmatpush.msra.mxu0 %v481
  %507 = vmatmul.f32.gmra.mxu0 %v486
  %v508 = vpop.f32.mrf.mxu0
  %v509 = vadd.f32 0.0, %v508
  %510 = vmatmul.f32.gmra.mxu0 %v489
  %v511 = vpop.f32.mrf.mxu0
  %v512 = vadd.f32 0.0, %v511
  %513 = vdwg.mxu0
  %v514 = vadd.f32 %v468, %v509
  %v515 = vadd.f32 %v471, %v512
  %v516 = vld [vmem:[%s1 + $0x1a8] sm:$0x1]
  %v517 = vperm.slane %v516, 0
  %v518 = vadd.f32 %v514, %v517
  %v519 = vadd.f32 %v515, %v517
  %520 = vst.msk [vmem:[#allocation2] sm:$0xff] %vm42, %v518
  %521 = vst.msk [vmem:[#allocation2 + $0x8] sm:$0xff] %vm42, %v519
  %v522 = vld [vmem:[#allocation2] ss:$2 sm:$0xff]
  %v523 = vld [vmem:[%s377] ss:$2 sm:$0xff]
  %v524 = vrot.slane %v523, 7
  %v525 = vld [vmem:[%s1] sm:$0xff]
  %v526 = vmul.f32 %v524, %v525
  %v527 = vadd.f32 %v522, %v523
  %v528 = vadd.f32 %v527, %v526
  %v529 = vmul.f32 %v528, 0.33333334
  %v530 = vld [vmem:[%s1 + $0x1b0] sm:$0x1]
  %v531 = vperm.slane %v530, 0
  %v532 = vadd.f32 %v529, %v531
  %v533 = vmax.f32 %v532, 0.0
  %v534 = vld [vmem:[%s1 + $0x1d8] sm:$0xff]
  %v535 = vld [vmem:[%s1 + $0x1e0] sm:$0xff]
  %v536 = vld [vmem:[%s1 + $0x1e8] sm:$0xff]
  %v537 = vld [vmem:[%s1 + $0x1f0] sm:$0xff]
  %v539 = vsel %vm42, %v533, 0
  %541 = vmatpush.msra.mxu0 0.0
  %542 = vmatpush.msra.mxu0 0.0
  %543 = vmatpush.msra.mxu0 0.0
  %544 = vmatpush.msra.mxu0 0.0
  %545 = vmatpush.msra.mxu0 0.0
  %546 = vmatpush.msra.mxu0 0.0
  %547 = vmatpush.msra.mxu0 0.0
  %548 = vmatpush.msra.mxu0 0.0
  %549 = vmatpush.msra.mxu0 0.0
  %550 = vmatpush.msra.mxu0 0.0
  %551 = vmatpush.msra.mxu0 0.0
  %552 = vmatpush.msra.mxu0 0.0
  %553 = vmatpush.msra.mxu0 %v537
  %554 = vmatpush.msra.mxu0 %v536
  %555 = vmatpush.msra.mxu0 %v535
  %556 = vmatpush.msra.mxu0 %v534
  %557 = vmatmul.f32.gmra.mxu0 %v539
  %v558 = vpop.f32.mrf.mxu0
  %v559 = vadd.f32 0.0, %v558
  %560 = vdwg.mxu0
  %v561 = vld [vmem:[%s1 + $0x1f8] sm:$0xff]
  %v562 = vld [vmem:[%s1 + $0x200] sm:$0xff]
  %v563 = vld [vmem:[%s1 + $0x208] sm:$0xff]
  %v564 = vld [vmem:[%s1 + $0x210] sm:$0xff]
  %v565 = vrot.slane %v533, 1
  %v566 = vld [vmem:[%s1 + $0x8] sm:$0xff]
  %v567 = vmul.f32 %v565, %v566
  %v568 = vld [vmem:[%s1 + $0x1b8] sm:$0xff]
  %v569 = vld [vmem:[%s1 + $0x1c0] sm:$0xff]
  %v570 = vld [vmem:[%s1 + $0x1c8] sm:$0xff]
  %v571 = vld [vmem:[%s1 + $0x1d0] sm:$0xff]
  %v573 = vsel %vm42, %v567, 0
  %575 = vmatpush.msra.mxu0 0.0
  %576 = vmatpush.msra.mxu0 0.0
  %577 = vmatpush.msra.mxu0 0.0
  %578 = vmatpush.msra.mxu0 0.0
  %579 = vmatpush.msra.mxu0 0.0
  %580 = vmatpush.msra.mxu0 0.0
  %581 = vmatpush.msra.mxu0 0.0
  %582 = vmatpush.msra.mxu0 0.0
  %583 = vmatpush.msra.mxu0 0.0
  %584 = vmatpush.msra.mxu0 0.0
  %585 = vmatpush.msra.mxu0 0.0
  %586 = vmatpush.msra.mxu0 0.0
  %587 = vmatpush.msra.mxu0 %v571
  %588 = vmatpush.msra.mxu0 %v570
  %589 = vmatpush.msra.mxu0 %v569
  %590 = vmatpush.msra.mxu0 %v568
  %591 = vmatmul.f32.gmra.mxu0 %v573
  %v592 = vpop.f32.mrf.mxu0
  %v593 = vadd.f32 0.0, %v592
  %594 = vdwg.mxu0
  %595 = vmatpush.msra.mxu0 0.0
  %596 = vmatpush.msra.mxu0 0.0
  %597 = vmatpush.msra.mxu0 0.0
  %598 = vmatpush.msra.mxu0 0.0
  %599 = vmatpush.msra.mxu0 0.0
  %600 = vmatpush.msra.mxu0 0.0
  %601 = vmatpush.msra.mxu0 0.0
  %602 = vmatpush.msra.mxu0 0.0
  %603 = vmatpush.msra.mxu0 0.0
  %604 = vmatpush.msra.mxu0 0.0
  %605 = vmatpush.msra.mxu0 0.0
  %606 = vmatpush.msra.mxu0 0.0
  %607 = vmatpush.msra.mxu0 %v564
  %608 = vmatpush.msra.mxu0 %v563
  %609 = vmatpush.msra.mxu0 %v562
  %610 = vmatpush.msra.mxu0 %v561
  %611 = vmatmul.f32.gmra.mxu0 %v539
  %v612 = vpop.f32.mrf.mxu0
  %v613 = vadd.f32 %v593, %v612
  %614 = vdwg.mxu0
  %v615 = vld [vmem:[%s1 + $0x2f0] sm:$0xff]
  %v616 = vld [vmem:[%s1 + $0x2f8] sm:$0xff]
  %v617 = vld [vmem:[%s1 + $0x300] sm:$0xff]
  %v618 = vld [vmem:[%s1 + $0x308] sm:$0xff]
  %vm619 = vcmask 64512
  %v621 = vsel %vm619, %v617, 0
  %v624 = vsel %vm619, %v618, 0
  %626 = vmatpush.msra.mxu0 0.0
  %627 = vmatpush.msra.mxu0 0.0
  %628 = vmatpush.msra.mxu0 0.0
  %629 = vmatpush.msra.mxu0 0.0
  %630 = vmatpush.msra.mxu0 0.0
  %631 = vmatpush.msra.mxu0 0.0
  %632 = vmatpush.msra.mxu0 0.0
  %633 = vmatpush.msra.mxu0 0.0
  %634 = vmatpush.msra.mxu0 0.0
  %635 = vmatpush.msra.mxu0 0.0
  %636 = vmatpush.msra.mxu0 0.0
  %637 = vmatpush.msra.mxu0 0.0
  %638 = vmatpush.msra.mxu0 0.0
  %639 = vmatpush.msra.mxu0 0.0
  %640 = vmatpush.msra.mxu0 0.0
  %641 = vmatpush.msra.mxu0 %v613
  %642 = vmatmul.f32.gmra.mxu0 %v621
  %v643 = vpop.f32.mrf.mxu0
  %v644 = vadd.f32 0.0, %v643
  %645 = vmatmul.f32.gmra.mxu0 %v624
  %v646 = vpop.f32.mrf.mxu0
  %v647 = vadd.f32 0.0, %v646
  %648 = vdwg.mxu0
  %v650 = vsel %vm619, %v615, 0
  %v653 = vsel %vm619, %v616, 0
  %655 = vmatpush.msra.mxu0 0.0
  %656 = vmatpush.msra.mxu0 0.0
  %657 = vmatpush.msra.mxu0 0.0
  %658 = vmatpush.msra.mxu0 0.0
  %659 = vmatpush.msra.mxu0 0.0
  %660 = vmatpush.msra.mxu0 0.0
  %661 = vmatpush.msra.mxu0 0.0
  %662 = vmatpush.msra.mxu0 0.0
  %663 = vmatpush.msra.mxu0 0.0
  %664 = vmatpush.msra.mxu0 0.0
  %665 = vmatpush.msra.mxu0 0.0
  %666 = vmatpush.msra.mxu0 0.0
  %667 = vmatpush.msra.mxu0 0.0
  %668 = vmatpush.msra.mxu0 0.0
  %669 = vmatpush.msra.mxu0 0.0
  %670 = vmatpush.msra.mxu0 %v559
  %671 = vmatmul.f32.gmra.mxu0 %v650
  %v672 = vpop.f32.mrf.mxu0
  %v673 = vadd.f32 %v644, %v672
  %674 = vmatmul.f32.gmra.mxu0 %v653
  %v675 = vpop.f32.mrf.mxu0
  %v676 = vadd.f32 %v647, %v675
  %677 = vdwg.mxu0
  %v678 = vld [vmem:[%s1 + $0x218] sm:$0x1]
  %v679 = vperm.slane %v678, 0
  %v680 = vadd.f32 %v673, %v679
  %v681 = vadd.f32 %v676, %v679
  %v682 = vmax.f32 %v680, 0.0
  %v683 = vmax.f32 %v681, 0.0
  %v684 = vld [vmem:[%s1 + $0x240] sm:$0xff]
  %v685 = vld [vmem:[%s1 + $0x248] sm:$0xff]
  %v686 = vld [vmem:[%s1 + $0x250] sm:$0xff]
  %v687 = vld [vmem:[%s1 + $0x258] sm:$0xff]
  %v689 = vsel %vm42, %v682, 0
  %v692 = vsel %vm42, %v683, 0
  %694 = vmatpush.msra.mxu0 0.0
  %695 = vmatpush.msra.mxu0 0.0
  %696 = vmatpush.msra.mxu0 0.0
  %697 = vmatpush.msra.mxu0 0.0
  %698 = vmatpush.msra.mxu0 0.0
  %699 = vmatpush.msra.mxu0 0.0
  %700 = vmatpush.msra.mxu0 0.0
  %701 = vmatpush.msra.mxu0 0.0
  %702 = vmatpush.msra.mxu0 0.0
  %703 = vmatpush.msra.mxu0 0.0
  %704 = vmatpush.msra.mxu0 0.0
  %705 = vmatpush.msra.mxu0 0.0
  %706 = vmatpush.msra.mxu0 %v687
  %707 = vmatpush.msra.mxu0 %v686
  %708 = vmatpush.msra.mxu0 %v685
  %709 = vmatpush.msra.mxu0 %v684
  %710 = vmatmul.f32.gmra.mxu0 %v689
  %v711 = vpop.f32.mrf.mxu0
  %v712 = vadd.f32 0.0, %v711
  %713 = vmatmul.f32.gmra.mxu0 %v692
  %v714 = vpop.f32.mrf.mxu0
  %v715 = vadd.f32 0.0, %v714
  %716 = vdwg.mxu0
  %v717 = vld [vmem:[%s1 + $0x260] sm:$0xff]
  %v718 = vld [vmem:[%s1 + $0x268] sm:$0xff]
  %v719 = vld [vmem:[%s1 + $0x270] sm:$0xff]
  %v720 = vld [vmem:[%s1 + $0x278] sm:$0xff]
  %v721 = vrot.slane %v682, 1
  %v722 = vrot.slane %v683, 1
  %v723 = vsel %vm129, %v721, %v722
  %v724 = vsel %vm129, %v722, %v721
  %v725 = vmul.f32 %v723, %v477
  %v726 = vmul.f32 %v724, %v478
  %v727 = vld [vmem:[%s1 + $0x220] sm:$0xff]
  %v728 = vld [vmem:[%s1 + $0x228] sm:$0xff]
  %v729 = vld [vmem:[%s1 + $0x230] sm:$0xff]
  %v730 = vld [vmem:[%s1 + $0x238] sm:$0xff]
  %v732 = vsel %vm42, %v725, 0
  %v735 = vsel %vm42, %v726, 0
  %737 = vmatpush.msra.mxu0 0.0
  %738 = vmatpush.msra.mxu0 0.0
  %739 = vmatpush.msra.mxu0 0.0
  %740 = vmatpush.msra.mxu0 0.0
  %741 = vmatpush.msra.mxu0 0.0
  %742 = vmatpush.msra.mxu0 0.0
  %743 = vmatpush.msra.mxu0 0.0
  %744 = vmatpush.msra.mxu0 0.0
  %745 = vmatpush.msra.mxu0 0.0
  %746 = vmatpush.msra.mxu0 0.0
  %747 = vmatpush.msra.mxu0 0.0
  %748 = vmatpush.msra.mxu0 0.0
  %749 = vmatpush.msra.mxu0 %v730
  %750 = vmatpush.msra.mxu0 %v729
  %751 = vmatpush.msra.mxu0 %v728
  %752 = vmatpush.msra.mxu0 %v727
  %753 = vmatmul.f32.gmra.mxu0 %v732
  %v754 = vpop.f32.mrf.mxu0
  %v755 = vadd.f32 0.0, %v754
  %756 = vmatmul.f32.gmra.mxu0 %v735
  %v757 = vpop.f32.mrf.mxu0
  %v758 = vadd.f32 0.0, %v757
  %759 = vdwg.mxu0
  %760 = vmatpush.msra.mxu0 0.0
  %761 = vmatpush.msra.mxu0 0.0
  %762 = vmatpush.msra.mxu0 0.0
  %763 = vmatpush.msra.mxu0 0.0
  %764 = vmatpush.msra.mxu0 0.0
  %765 = vmatpush.msra.mxu0 0.0
  %766 = vmatpush.msra.mxu0 0.0
  %767 = vmatpush.msra.mxu0 0.0
  %768 = vmatpush.msra.mxu0 0.0
  %769 = vmatpush.msra.mxu0 0.0
  %770 = vmatpush.msra.mxu0 0.0
  %771 = vmatpush.msra.mxu0 0.0
  %772 = vmatpush.msra.mxu0 %v720
  %773 = vmatpush.msra.mxu0 %v719
  %774 = vmatpush.msra.mxu0 %v718
  %775 = vmatpush.msra.mxu0 %v717
  %776 = vmatmul.f32.gmra.mxu0 %v689
  %v777 = vpop.f32.mrf.mxu0
  %v778 = vadd.f32 %v755, %v777
  %779 = vmatmul.f32.gmra.mxu0 %v692
  %v780 = vpop.f32.mrf.mxu0
  %v781 = vadd.f32 %v758, %v780
  %782 = vdwg.mxu0
  %v783 = vld [vmem:[%s1 + $0x310] sm:$0xff]
  %v784 = vld [vmem:[%s1 + $0x318] sm:$0xff]
  %v785 = vld [vmem:[%s1 + $0x320] sm:$0xff]
  %v786 = vld [vmem:[%s1 + $0x328] sm:$0xff]
  %v787 = vld [vmem:[%s1 + $0x330] sm:$0xff]
  %v788 = vld [vmem:[%s1 + $0x338] sm:$0xff]
  %v789 = vld [vmem:[%s1 + $0x340] sm:$0xff]
  %v790 = vld [vmem:[%s1 + $0x348] sm:$0xff]
  %vm791 = vcmask 130048
  %v793 = vsel %vm791, %v787, 0
  %v796 = vsel %vm791, %v788, 0
  %v799 = vsel %vm791, %v789, 0
  %v802 = vsel %vm791, %v790, 0
  %804 = vmatpush.msra.mxu0 0.0
  %805 = vmatpush.msra.mxu0 0.0
  %806 = vmatpush.msra.mxu0 0.0
  %807 = vmatpush.msra.mxu0 0.0
  %808 = vmatpush.msra.mxu0 0.0
  %809 = vmatpush.msra.mxu0 0.0
  %810 = vmatpush.msra.mxu0 0.0
  %811 = vmatpush.msra.mxu0 0.0
  %812 = vmatpush.msra.mxu0 0.0
  %813 = vmatpush.msra.mxu0 0.0
  %814 = vmatpush.msra.mxu0 0.0
  %815 = vmatpush.msra.mxu0 0.0
  %816 = vmatpush.msra.mxu0 0.0
  %817 = vmatpush.msra.mxu0 0.0
  %818 = vmatpush.msra.mxu0 %v781
  %819 = vmatpush.msra.mxu0 %v778
  %820 = vmatmul.f32.gmra.mxu0 %v793
  %v821 = vpop.f32.mrf.mxu0
  %v822 = vadd.f32 0.0, %v821
  %823 = vmatmul.f32.gmra.mxu0 %v796
  %v824 = vpop.f32.mrf.mxu0
  %v825 = vadd.f32 0.0, %v824
  %826 = vmatmul.f32.gmra.mxu0 %v799
  %v827 = vpop.f32.mrf.mxu0
  %v828 = vadd.f32 0.0, %v827
  %829 = vmatmul.f32.gmra.mxu0 %v802
  %v830 = vpop.f32.mrf.mxu0
  %v831 = vadd.f32 0.0, %v830
  %832 = vdwg.mxu0
  %v834 = vsel %vm791, %v783, 0
  %v837 = vsel %vm791, %v784, 0
  %v840 = vsel %vm791, %v785, 0
  %v843 = vsel %vm791, %v786, 0
  %845 = vmatpush.msra.mxu0 0.0
  %846 = vmatpush.msra.mxu0 0.0
  %847 = vmatpush.msra.mxu0 0.0
  %848 = vmatpush.msra.mxu0 0.0
  %849 = vmatpush.msra.mxu0 0.0
  %850 = vmatpush.msra.mxu0 0.0
  %851 = vmatpush.msra.mxu0 0.0
  %852 = vmatpush.msra.mxu0 0.0
  %853 = vmatpush.msra.mxu0 0.0
  %854 = vmatpush.msra.mxu0 0.0
  %855 = vmatpush.msra.mxu0 0.0
  %856 = vmatpush.msra.mxu0 0.0
  %857 = vmatpush.msra.mxu0 0.0
  %858 = vmatpush.msra.mxu0 0.0
  %859 = vmatpush.msra.mxu0 %v715
  %860 = vmatpush.msra.mxu0 %v712
  %861 = vmatmul.f32.gmra.mxu0 %v834
  %v862 = vpop.f32.mrf.mxu0
  %v863 = vadd.f32 %v822, %v862
  %864 = vmatmul.f32.gmra.mxu0 %v837
  %v865 = vpop.f32.mrf.mxu0
  %v866 = vadd.f32 %v825, %v865
  %867 = vmatmul.f32.gmra.mxu0 %v840
  %v868 = vpop.f32.mrf.mxu0
  %v869 = vadd.f32 %v828, %v868
  %870 = vmatmul.f32.gmra.mxu0 %v843
  %v871 = vpop.f32.mrf.mxu0
  %v872 = vadd.f32 %v831, %v871
  %873 = vdwg.mxu0
  %v874 = vld [vmem:[%s1 + $0x280] sm:$0x1]
  %v875 = vperm.slane %v874, 0
  %v876 = vadd.f32 %v863, %v875
  %v877 = vadd.f32 %v866, %v875
  %v878 = vadd.f32 %v869, %v875
  %v879 = vadd.f32 %v872, %v875
  %v880 = vmax.f32 %v876, 0.0
  %v881 = vmax.f32 %v877, 0.0
  %v882 = vmax.f32 %v878, 0.0
  %v883 = vmax.f32 %v879, 0.0
  %v884 = vrot.slane %v880, 7
  %v885 = vrot.slane %v881, 7
  %v886 = vrot.slane %v882, 7
  %v887 = vrot.slane %v883, 7
  %v888 = vsel %vm21, %v886, %v887
  %v889 = vsel %vm21, %v885, %v886
  %v890 = vsel %vm21, %v884, %v885
  %v891 = vsel %vm21, %v887, %v884
  %v892 = vmul.f32 %v891, %v26
  %v893 = vmul.f32 %v890, %v27
  %v894 = vmul.f32 %v889, %v28
  %v895 = vmul.f32 %v888, %v29
  %v896 = vld [vmem:[%s1 + $0x288] sm:$0xff]
  %v897 = vld [vmem:[%s1 + $0x290] sm:$0xff]
  %v898 = vld [vmem:[%s1 + $0x298] sm:$0xff]
  %v899 = vld [vmem:[%s1 + $0x2a0] sm:$0xff]
  %v900 = vld [vmem:[%s1 + $0x2a8] sm:$0xff]
  %v901 = vld [vmem:[%s1 + $0x2b0] sm:$0xff]
  %v902 = vld [vmem:[%s1 + $0x2b8] sm:$0xff]
  %v903 = vld [vmem:[%s1 + $0x2c0] sm:$0xff]
  %v905 = vsel %vm42, %v880, 0
  %v908 = vsel %vm42, %v881, 0
  %v911 = vsel %vm42, %v882, 0
  %v914 = vsel %vm42, %v883, 0
  %916 = vmatpush.msra.mxu0 0.0
  %917 = vmatpush.msra.mxu0 0.0
  %918 = vmatpush.msra.mxu0 0.0
  %919 = vmatpush.msra.mxu0 0.0
  %920 = vmatpush.msra.mxu0 0.0
  %921 = vmatpush.msra.mxu0 0.0
  %922 = vmatpush.msra.mxu0 0.0
  %923 = vmatpush.msra.mxu0 0.0
  %924 = vmatpush.msra.mxu0 0.0
  %925 = vmatpush.msra.mxu0 0.0
  %926 = vmatpush.msra.mxu0 0.0
  %927 = vmatpush.msra.mxu0 0.0
  %928 = vmatpush.msra.mxu0 %v903
  %929 = vmatpush.msra.mxu0 %v902
  %930 = vmatpush.msra.mxu0 %v901
  %931 = vmatpush.msra.mxu0 %v900
  %932 = vmatmul.f32.gmra.mxu0 %v905
  %v933 = vpop.f32.mrf.mxu0
  %v934 = vadd.f32 0.0, %v933
  %935 = vmatmul.f32.gmra.mxu0 %v908
  %v936 = vpop.f32.mrf.mxu0
  %v937 = vadd.f32 0.0, %v936
  %938 = vmatmul.f32.gmra.mxu0 %v911
  %v939 = vpop.f32.mrf.mxu0
  %v940 = vadd.f32 0.0, %v939
  %941 = vmatmul.f32.gmra.mxu0 %v914
  %v942 = vpop.f32.mrf.mxu0
  %v943 = vadd.f32 0.0, %v942
  %944 = vdwg.mxu0
  %v946 = vsel %vm42, %v892, 0
  %v949 = vsel %vm42, %v893, 0
  %v952 = vsel %vm42, %v894, 0
  %v955 = vsel %vm42, %v895, 0
  %957 = vmatpush.msra.mxu0 0.0
  %958 = vmatpush.msra.mxu0 0.0
  %959 = vmatpush.msra.mxu0 0.0
  %960 = vmatpush.msra.mxu0 0.0
  %961 = vmatpush.msra.mxu0 0.0
  %962 = vmatpush.msra.mxu0 0.0
  %963 = vmatpush.msra.mxu0 0.0
  %964 = vmatpush.msra.mxu0 0.0
  %965 = vmatpush.msra.mxu0 0.0
  %966 = vmatpush.msra.mxu0 0.0
  %967 = vmatpush.msra.mxu0 0.0
  %968 = vmatpush.msra.mxu0 0.0
  %969 = vmatpush.msra.mxu0 %v899
  %970 = vmatpush.msra.mxu0 %v898
  %971 = vmatpush.msra.mxu0 %v897
  %972 = vmatpush.msra.mxu0 %v896
  %973 = vmatmul.f32.gmra.mxu0 %v946
  %v974 = vpop.f32.mrf.mxu0
  %v975 = vadd.f32 %v934, %v974
  %976 = vmatmul.f32.gmra.mxu0 %v949
  %v977 = vpop.f32.mrf.mxu0
  %v978 = vadd.f32 %v937, %v977
  %979 = vmatmul.f32.gmra.mxu0 %v952
  %v980 = vpop.f32.mrf.mxu0
  %v981 = vadd.f32 %v940, %v980
  %982 = vmatmul.f32.gmra.mxu0 %v955
  %v983 = vpop.f32.mrf.mxu0
  %v984 = vadd.f32 %v943, %v983
  %985 = vdwg.mxu0
  %v986 = vrot.slane %v880, 1
  %v987 = vrot.slane %v881, 1
  %v988 = vrot.slane %v882, 1
  %v989 = vrot.slane %v883, 1
  %v990 = vsel %vm129, %v988, %v989
  %v991 = vsel %vm129, %v987, %v988
  %v992 = vsel %vm129, %v986, %v987
  %v993 = vsel %vm129, %v989, %v986
  %v994 = vmul.f32 %v992, %v134
  %v995 = vmul.f32 %v991, %v135
  %v996 = vmul.f32 %v990, %v136
  %v997 = vmul.f32 %v993, %v137
  %v998 = vld [vmem:[%s1 + $0x2c8] sm:$0xff]
  %v999 = vld [vmem:[%s1 + $0x2d0] sm:$0xff]
  %v1000 = vld [vmem:[%s1 + $0x2d8] sm:$0xff]
  %v1001 = vld [vmem:[%s1 + $0x2e0] sm:$0xff]
  %v1003 = vsel %vm42, %v994, 0
  %v1006 = vsel %vm42, %v995, 0
  %v1009 = vsel %vm42, %v996, 0
  %v1012 = vsel %vm42, %v997, 0
  %1014 = vmatpush.msra.mxu0 0.0
  %1015 = vmatpush.msra.mxu0 0.0
  %1016 = vmatpush.msra.mxu0 0.0
  %1017 = vmatpush.msra.mxu0 0.0
  %1018 = vmatpush.msra.mxu0 0.0
  %1019 = vmatpush.msra.mxu0 0.0
  %1020 = vmatpush.msra.mxu0 0.0
  %1021 = vmatpush.msra.mxu0 0.0
  %1022 = vmatpush.msra.mxu0 0.0
  %1023 = vmatpush.msra.mxu0 0.0
  %1024 = vmatpush.msra.mxu0 0.0
  %1025 = vmatpush.msra.mxu0 0.0
  %1026 = vmatpush.msra.mxu0 %v1001
  %1027 = vmatpush.msra.mxu0 %v1000
  %1028 = vmatpush.msra.mxu0 %v999
  %1029 = vmatpush.msra.mxu0 %v998
  %1030 = vmatmul.f32.gmra.mxu0 %v1003
  %v1031 = vpop.f32.mrf.mxu0
  %v1032 = vadd.f32 0.0, %v1031
  %1033 = vmatmul.f32.gmra.mxu0 %v1006
  %v1034 = vpop.f32.mrf.mxu0
  %v1035 = vadd.f32 0.0, %v1034
  %1036 = vmatmul.f32.gmra.mxu0 %v1009
  %v1037 = vpop.f32.mrf.mxu0
  %v1038 = vadd.f32 0.0, %v1037
  %1039 = vmatmul.f32.gmra.mxu0 %v1012
  %v1040 = vpop.f32.mrf.mxu0
  %v1041 = vadd.f32 0.0, %v1040
  %1042 = vdwg.mxu0
  %v1043 = vadd.f32 %v975, %v1032
  %v1044 = vadd.f32 %v978, %v1035
  %v1045 = vadd.f32 %v981, %v1038
  %v1046 = vadd.f32 %v984, %v1041
  %v1047 = vld [vmem:[%s1 + $0x2e8] sm:$0x1]
  %v1048 = vperm.slane %v1047, 0
  %v1049 = vadd.f32 %v1043, %v1048
  %v1050 = vadd.f32 %v1044, %v1048
  %v1051 = vadd.f32 %v1045, %v1048
  %v1052 = vadd.f32 %v1046, %v1048
  %v1053 = vmax.f32 %v1049, 0.0
  %v1054 = vmax.f32 %v1050, 0.0
  %v1055 = vmax.f32 %v1051, 0.0
  %v1056 = vmax.f32 %v1052, 0.0
  %1057 = vst.msk [vmem:[%s2] sm:$0xff] %vm42, %v1053
  %1058 = vst.msk [vmem:[%s2 + $0x8] sm:$0xff] %vm42, %v1054
  %1059 = vst.msk [vmem:[%s2 + $0x10] sm:$0xff] %vm42, %v1055
  %1060 = vst.msk [vmem:[%s2 + $0x18] sm:$0xff] %vm42, %v1056
  // Predicated region
  $region10: #{forward.1} parent=0 // pred_check
    _
  $region11: #{forward.1} parent=0 // pred_check_branch
    %1062 = sbr.rel (0) target = $region13
  $region12: #{forward.1} parent=0 // pred_region
    _
  $region13: #{forward.1} parent=0 // pred_fallthru
    _
  // Predicated region
  $region14: #{forward.1} parent=0 // pred_check
    _
  $region15: #{forward.1} parent=0 // pred_check_branch
    %1064 = sbr.rel (0) target = $region17
  $region16: #{forward.1} parent=0 // pred_region
    _
  $region17: #{forward.1} parent=0 // pred_fallthru
    _

</llo_original>
